<compile_context>
chip_gen: v5e
topology: v5e:2x2
jax: 0.10.0
libtpu: 0.0.40
codegen_flags: <defaults>
</compile_context>

<pallas_src>
import functools

import jax
import jax.numpy as jnp
from jax import lax
from jax.experimental import pallas as pl
from jax.experimental.pallas import tpu as pltpu


# Sized off v7x (32 MiB scoped / 64 MiB physical VMEM) with double-buffering
# headroom; also safely inside the v5e 16 MiB scoped default.
_SINGLE_BLOCK_BYTES = 12 << 20
_FUSED_MAX_F = 1024          # K + K^-1 resident in VMEM => 2*F^2*4 B <= 8 MiB


def _vmem_spec():
    return pl.BlockSpec(memory_space=pltpu.MemorySpace.VMEM)


def _smem_spec():
    return pl.BlockSpec(memory_space=pltpu.MemorySpace.SMEM)


def _pick_tile(n, preferred):
    for t in preferred:
        if t <= n and n % t == 0:
            return t
    return n


# ---------------------------------------------------------------------------
# Kernel 1: Hodge Laplacian (single block, small meshes)
#   K = diag(B2^2) @ d1 @ diag(1/(B1^2+1e-5)) @ diag(1/(D1^2+1e-5)) @ d1.T
#       @ diag(D2^2) + 1e-6 * I
# Diagonal mass matrices are folded into element-wise scales; d1.T is never
# materialized (NT dot_general); the 1e-6 diagonal is built in-kernel.
# ---------------------------------------------------------------------------
def hodge_k_kernel(d1_ref, b1_ref, b2_ref, d1v_ref, d2_ref, k_ref):
    d1 = d1_ref[...]                                            # (F, E)
    w = 1.0 / ((b1_ref[...] ** 2 + 1e-5) *
               (d1v_ref[...] ** 2 + 1e-5))                      # (1, E)
    a = d1 * w                                                  # (F, E)
    # NT contraction on the MXU: K0[i, j] = sum_e a[i, e] * d1[j, e]
    k0 = lax.dot_general(a, d1,
                         dimension_numbers=(((1,), (1,)), ((), ())),
                         preferred_element_type=jnp.float32)    # (F, F)
    F, _ = k_ref.shape
    ii = lax.broadcasted_iota(jnp.int32, (F, F), 0)
    jj = lax.broadcasted_iota(jnp.int32, (F, F), 1)
    diag = jnp.where(ii == jj, jnp.float32(1e-6), jnp.float32(0.0))
    k_ref[...] = (b2_ref[...] ** 2) * k0 * (d2_ref[...] ** 2) + diag


def pallas_hodge_laplacian(d1, b1_vals, b2_vals, d1_vals, d2_vals):
    F, E = d1.shape
    return pl.pallas_call(
        hodge_k_kernel,
        out_shape=jax.ShapeDtypeStruct((F, F), jnp.float32),
        in_specs=[_vmem_spec()] * 5,
        out_specs=_vmem_spec(),
    )(d1,
      b1_vals.reshape(1, E),
      b2_vals.reshape(F, 1),
      d1_vals.reshape(1, E),
      d2_vals.reshape(1, F))


# ---------------------------------------------------------------------------
# Kernel 1b: grid-tiled Hodge Laplacian for large meshes.
#   grid = (F/tm, F/tn, E/tk); K tile (i, j) accumulates over E chunks in an
#   f32 VMEM scratch; the 1e-6 diagonal is added in the finalize step only.
# ---------------------------------------------------------------------------
def hodge_k_tiled_kernel(d1a_ref, d1b_ref, b1_ref, d1v_ref, b2_ref, d2_ref,
                         k_ref, acc_ref):
    # program_id is read at the TOP of the body (never inside a pl.when body:
    # the interpret fallback cannot lower program_id nested in cond branches).
    i = pl.program_id(0)
    j = pl.program_id(1)
    kk = pl.program_id(2)

    @pl.when(kk == 0)
    def _():
        acc_ref[...] = jnp.zeros_like(acc_ref)

    w = 1.0 / ((b1_ref[...] ** 2 + 1e-5) *
               (d1v_ref[...] ** 2 + 1e-5))                      # (1, tk)
    a = d1a_ref[...] * w                                        # (tm, tk)
    acc_ref[...] += lax.dot_general(
        a, d1b_ref[...],
        dimension_numbers=(((1,), (1,)), ((), ())),
        preferred_element_type=jnp.float32)                     # (tm, tn)

    @pl.when(kk == pl.num_programs(2) - 1)
    def _():
        tm, tn = k_ref.shape
        ii = lax.broadcasted_iota(jnp.int32, (tm, tn), 0) + i * tm
        jj = lax.broadcasted_iota(jnp.int32, (tm, tn), 1) + j * tn
        diag = jnp.where(ii == jj, jnp.float32(1e-6), jnp.float32(0.0))
        k_ref[...] = ((b2_ref[...] ** 2) * acc_ref[...] *
                      (d2_ref[...] ** 2) + diag)


def pallas_hodge_laplacian_tiled(d1, b1_vals, b2_vals, d1_vals, d2_vals,
                                 *, tm=None, tn=None, tk=None):
    F, E = d1.shape
    tm = tm or _pick_tile(F, (256, 128))
    tn = tn or _pick_tile(F, (256, 128))
    tk = tk or _pick_tile(E, (512, 256, 128))
    assert F % tm == 0 and F % tn == 0 and E % tk == 0
    grid = (F // tm, F // tn, E // tk)
    return pl.pallas_call(
        hodge_k_tiled_kernel,
        out_shape=jax.ShapeDtypeStruct((F, F), jnp.float32),
        grid_spec=pltpu.PrefetchScalarGridSpec(
            num_scalar_prefetch=0,
            grid=grid,
            in_specs=[
                pl.BlockSpec((tm, tk), lambda i, j, k: (i, k)),   # d1 row panel
                pl.BlockSpec((tn, tk), lambda i, j, k: (j, k)),   # d1 (NT) panel
                pl.BlockSpec((1, tk), lambda i, j, k: (0, k)),    # B1 vals
                pl.BlockSpec((1, tk), lambda i, j, k: (0, k)),    # D1 vals
                pl.BlockSpec((tm, 1), lambda i, j, k: (i, 0)),    # B2 vals
                pl.BlockSpec((1, tn), lambda i, j, k: (0, j)),    # D2 vals
            ],
            out_specs=pl.BlockSpec((tm, tn), lambda i, j, k: (i, j)),
            scratch_shapes=[pltpu.VMEM((tm, tn), jnp.float32)]),
        compiler_params=pltpu.CompilerParams(
            dimension_semantics=("parallel", "parallel", "arbitrary")),
    )(d1, d1,
      b1_vals.reshape(1, E),
      d1_vals.reshape(1, E),
      b2_vals.reshape(F, 1),
      d2_vals.reshape(1, F))


def _hodge_laplacian(d1, b1_vals, b2_vals, d1_vals, d2_vals):
    F, E = d1.shape
    if 4 * (F * E + F * F) <= _SINGLE_BLOCK_BYTES:
        return pallas_hodge_laplacian(d1, b1_vals, b2_vals, d1_vals, d2_vals)
    return pallas_hodge_laplacian_tiled(d1, b1_vals, b2_vals, d1_vals, d2_vals)


# ---------------------------------------------------------------------------
# Kernel 2: residual + squared norm, single block (small/medium F).
#   r = K @ u - f emitted directly as a lane-dense (1, F) row (NT matvec),
#   ||r||^2 written as a scalar to SMEM.
# ---------------------------------------------------------------------------
def residual_kernel(k_ref, u_ref, f_ref, r_ref, nsq_ref):
    r = lax.dot_general(
        u_ref[...], k_ref[...],
        dimension_numbers=(((1,), (1,)), ((), ())),
        preferred_element_type=jnp.float32) - f_ref[...]        # (1, F)
    r_ref[...] = r
    nsq_ref[0] = jnp.sum(r * r)


def pallas_residual_and_norm(K, u, f):
    F = K.shape[0]
    r_row, nsq = pl.pallas_call(
        residual_kernel,
        out_shape=(jax.ShapeDtypeStruct((1, F), jnp.float32),
                   jax.ShapeDtypeStruct((1,), jnp.float32)),
        in_specs=[_vmem_spec()] * 3,
        out_specs=(_vmem_spec(), _smem_spec()),
    )(K, u.reshape(1, F), f.reshape(1, F))
    return r_row.reshape(F), nsq[0]


# ---------------------------------------------------------------------------
# Kernel 2b: grid-tiled, pipelined residual for large F.
#   grid = (F/tn, F/tk), reduction axis last; K streamed in (tn, tk) panels,
#   (1, tn) f32 accumulator, lane-dense (1, tn) output chunks, ||r||^2
#   accumulated in an SMEM scratch scalar and written at the last grid step.
# ---------------------------------------------------------------------------
def residual_tiled_kernel(k_ref, u_ref, f_ref, r_ref, nsq_ref,
                          acc_ref, nsq_acc_ref):
    j = pl.program_id(0)      # output chunk
    kk = pl.program_id(1)     # reduction chunk (last grid axis)

    @pl.when(jnp.logical_and(j == 0, kk == 0))
    def _():
        nsq_acc_ref[0] = jnp.float32(0.0)

    @pl.when(kk == 0)
    def _():
        acc_ref[...] = jnp.zeros_like(acc_ref)

    # r_chunk[0, n] += sum_e u[0, e] * K[j*tn + n, e]
    acc_ref[...] += lax.dot_general(
        u_ref[...], k_ref[...],
        dimension_numbers=(((1,), (1,)), ((), ())),
        preferred_element_type=jnp.float32)                     # (1, tn)

    @pl.when(kk == pl.num_programs(1) - 1)
    def _():
        r = acc_ref[...] - f_ref[...]
        r_ref[...] = r
        nsq_acc_ref[0] += jnp.sum(r * r)

    @pl.when(jnp.logical_and(j == pl.num_programs(0) - 1,
                             kk == pl.num_programs(1) - 1))
    def _():
        nsq_ref[0] = nsq_acc_ref[0]


def pallas_residual_and_norm_tiled(K, u, f, *, tn=None, tk=None):
    F = K.shape[0]
    tn = tn or _pick_tile(F, (256, 128))
    tk = tk or _pick_tile(F, (512, 256, 128))
    assert F % tn == 0 and F % tk == 0
    grid = (F // tn, F // tk)
    r_row, nsq = pl.pallas_call(
        residual_tiled_kernel,
        out_shape=(jax.ShapeDtypeStruct((1, F), jnp.float32),
                   jax.ShapeDtypeStruct((1,), jnp.float32)),
        grid_spec=pltpu.PrefetchScalarGridSpec(
            num_scalar_prefetch=0,
            grid=grid,
            in_specs=[
                pl.BlockSpec((tn, tk), lambda j, k: (j, k)),      # K panel
                pl.BlockSpec((1, tk), lambda j, k: (0, k)),       # u chunk
                pl.BlockSpec((1, tn), lambda j, k: (0, j)),       # f chunk
            ],
            out_specs=(
                pl.BlockSpec((1, tn), lambda j, k: (0, j)),       # r chunk
                pl.BlockSpec((1,), lambda j, k: (0,),
                             memory_space=pltpu.MemorySpace.SMEM),
            ),
            scratch_shapes=[pltpu.VMEM((1, tn), jnp.float32),
                            pltpu.SMEM((1,), jnp.float32)]),
        # nsq accumulates across output blocks in SMEM scratch -> keep the
        # whole grid on one core ("arbitrary" on both axes).
        compiler_params=pltpu.CompilerParams(
            dimension_semantics=("arbitrary", "arbitrary")),
    )(K, u.reshape(1, F), f.reshape(1, F))
    return r_row.reshape(F), nsq[0]


def _residual_and_norm(K, u, f):
    F = K.shape[0]
    if 4 * F * F <= _SINGLE_BLOCK_BYTES:
        return pallas_residual_and_norm(K, u, f)
    return pallas_residual_and_norm_tiled(K, u, f)


# ---------------------------------------------------------------------------
# Kernel 3: fused refinement + adjoint (small/medium F).
#   K and K^-1 stay resident in VMEM; the whole Newton-refinement loop, the
#   adjoint solve and the adjoint loss run inside one kernel (no per-iteration
#   dispatch, K read from HBM exactly once).
# ---------------------------------------------------------------------------
def ddec_refine_kernel(k_ref, kinv_ref, f_ref, phi_ref,
                       u_ref, lam_ref, adj_ref, *, iters, tol):
    K = k_ref[...]                                              # (F, F)
    Kinv = kinv_ref[...]                                        # (F, F)
    f = f_ref[...]                                              # (1, F)

    def matvec_nt(M, x):
        # y[0, i] = sum_e x[0, e] * M[i, e]  == (M @ x)^T as a row
        return lax.dot_general(x, M,
                               dimension_numbers=(((1,), (1,)), ((), ())),
                               preferred_element_type=jnp.float32)

    u = matvec_nt(Kinv, f)                                      # u0 = K^-1 f
    r = matvec_nt(K, u) - f                                     # K u0 - f
    tol_sq = jnp.float32(tol) * jnp.float32(tol)

    def body(_, carry):
        u, r = carry
        nsq = jnp.sum(r * r, axis=1, keepdims=True)             # (1, 1)
        # reference: `if norm < tol: break`  ->  update iff not (norm < tol)
        active = jnp.logical_not(nsq < tol_sq)                  # (1, 1) bool
        du = matvec_nt(Kinv, r)
        u_new = jnp.where(active, u - du, u)
        r_new = jnp.where(active, matvec_nt(K, u_new) - f, r)
        return (u_new, r_new)

    u, r = lax.fori_loop(0, iters, body, (u, r), unroll=bool(iters <= 8))

    # Adjoint: K^T lambda = 2 (phi - u)  =>  lambda = (K^-1)^T rhs
    rhs = 2.0 * (phi_ref[...] - u)                              # (1, F)
    lam = lax.dot_general(rhs, Kinv,
                          dimension_numbers=(((1,), (0,)), ((), ())),
                          preferred_element_type=jnp.float32)   # (1, F)

    u_ref[...] = u
    lam_ref[...] = lam
    adj_ref[0] = jnp.sum(lam * r)       # adj_loss = lambda^T (K u - f)


def _ddec_refine_fused(K, f, phi, *, iters, tol):
    F = K.shape[0]
    # TODO(synk): dense matrix inverse / LU has no clean Pallas equivalent;
    # K^-1 is computed once with XLA and reused for every in-kernel solve.
    Kinv = jnp.linalg.inv(K)
    kernel = functools.partial(ddec_refine_kernel, iters=iters, tol=tol)
    u, lam, adj = pl.pallas_call(
        kernel,
        out_shape=(jax.ShapeDtypeStruct((1, F), jnp.float32),
                   jax.ShapeDtypeStruct((1, F), jnp.float32),
                   jax.ShapeDtypeStruct((1,), jnp.float32)),
        in_specs=[_vmem_spec()] * 4,
        out_specs=(_vmem_spec(), _vmem_spec(), _smem_spec()),
    )(K, Kinv, f.reshape(1, F), phi.reshape(1, F))
    return u.reshape(F), lam.reshape(F), adj[0]


# ---------------------------------------------------------------------------
# LU path for large meshes: factor K once, device-side while_loop with the
# (single-block or tiled) residual kernel per iteration, K^T adjoint solve
# reusing the same factorization.
# ---------------------------------------------------------------------------
def _ddec_refine_lu(K, f, phi, *, iters, tol):
    # TODO(synk): dense LU factor / triangular solves have no clean Pallas
    # equivalent; factor once with jax.scipy.linalg and reuse everywhere.
    lu_piv = jax.scipy.linalg.lu_factor(K)

    u0 = jax.scipy.linalg.lu_solve(lu_piv, f)
    r0, nsq0 = _residual_and_norm(K, u0, f)

    def cond_fn(state):
        i, _, _, nsq = state
        return jnp.logical_and(i < iters,
                               jnp.logical_not(jnp.sqrt(nsq) < tol))

    def body_fn(state):
        i, u_n, r, _ = state
        du = jax.scipy.linalg.lu_solve(lu_piv, r)
        u_next = u_n - du
        r_next, nsq_next = _residual_and_norm(K, u_next, f)
        return i + 1, u_next, r_next, nsq_next

    _, u_n, r_fin, _ = lax.while_loop(
        cond_fn, body_fn, (jnp.int32(0), u0, r0, nsq0))

    lambda_adj = jax.scipy.linalg.lu_solve(lu_piv, 2.0 * (phi - u_n), trans=1)
    adj_loss = jnp.dot(lambda_adj, r_fin)   # r_fin == K u_n - f
    return u_n, lambda_adj, adj_loss


# ---------------------------------------------------------------------------
# Fully jitted forward pipeline (epsilon == 0).
# ---------------------------------------------------------------------------
@functools.partial(jax.jit, static_argnames=("iters", "tol"))
def ddec_forward(d1, b1_vals, b2_vals, d1_vals, d2_vals, f, phi, *, iters, tol):
    K = _hodge_laplacian(d1, b1_vals, b2_vals, d1_vals, d2_vals)
    F = K.shape[0]
    if F <= _FUSED_MAX_F:
        return _ddec_refine_fused(K, f, phi, iters=iters, tol=tol)
    return _ddec_refine_lu(K, f, phi, iters=iters, tol=tol)


# ---------------------------------------------------------------------------
# JAX/Pallas port of DDECModel (epsilon == 0 configuration)
# ---------------------------------------------------------------------------
class DDECModelPallas:
    def __init__(self, iters, tol, epsilon, in_dim, out_dim, properties, key):
        # TODO(synk): epsilon > 0 branch (per-element MLP operator + autograd
        # jacobian of the nonlinear operator) is not implemented.
        assert epsilon == 0.0
        self.iter = iters
        self.tol = tol
        self.epsilon = epsilon
        self.in_dim = in_dim
        self.out_dim = out_dim
        self.d1 = jnp.asarray(properties['d1'], jnp.float32)   # (F, E)
        self.d0 = jnp.asarray(properties['d0'], jnp.float32)   # unused here
        F, E = self.d1.shape
        k1, k2, k3, k4, k5 = jax.random.split(key, 5)
        # nn.Parameter(torch.randn(...)) -> deterministic normal init
        self.B1_vals = jax.random.normal(k1, (E,), jnp.float32)
        self.B2_vals = jax.random.normal(k2, (F,), jnp.float32)
        self.D1_vals = jax.random.normal(k3, (E,), jnp.float32)
        self.D2_vals = jax.random.normal(k4, (F,), jnp.float32)
        # phi_faces must be set externally before forward() in the reference;
        # initialized deterministically here.
        self.phi_faces = jax.random.normal(k5, (F,), jnp.float32)
        self.lambda_adj = None
        self.adj_loss = None
        self.f = None

    def compute_hodge_laplacian(self):
        return _hodge_laplacian(self.d1, self.B1_vals, self.B2_vals,
                                self.D1_vals, self.D2_vals)

    def forward(self, u, f):
        del u  # the reference overwrites the initial guess with solve(K, f)
        f = jnp.asarray(f, jnp.float32)
        self.f = f
        u_n, lambda_adj, adj_loss = ddec_forward(
            self.d1, self.B1_vals, self.B2_vals, self.D1_vals, self.D2_vals,
            f, self.phi_faces, iters=self.iter, tol=self.tol)
        self.lambda_adj = lambda_adj
        self.adj_loss = adj_loss
        return u_n


if __name__ == "__main__":
    key = jax.random.PRNGKey(0)
    k_d1, k_d0, k_u, k_f, k_params, k_big = jax.random.split(key, 6)

    # ---- small synthetic mesh: full DDEC forward (fused refinement path) ---
    F, E, V = 16, 32, 8          # faces, edges, vertices
    d1 = jax.random.normal(k_d1, (F, E), jnp.float32)   # face-edge operator
    d0 = jax.random.normal(k_d0, (E, V), jnp.float32)   # edge-vertex operator
    properties = {'d1': d1, 'd0': d0}

    model = DDECModelPallas(iters=5, tol=1e-6, epsilon=0.0,
                            in_dim=1, out_dim=1,
                            properties=properties, key=k_params)

    u0 = jax.random.normal(k_u, (F,), jnp.float32)
    f = jax.random.normal(k_f, (F,), jnp.float32)

    u_new = model.forward(u0, f)
    jax.block_until_ready((u_new, model.lambda_adj, model.adj_loss))

    # ---- medium mesh: exercise the tiled Hodge kernel, the tiled residual
    #      kernel and the LU refinement path used for large meshes -----------
    kb = jax.random.split(k_big, 8)
    Fb, Eb = 512, 1024
    d1_big = jax.random.normal(kb[0], (Fb, Eb), jnp.float32)
    b1_big = jax.random.normal(kb[1], (Eb,), jnp.float32)
    b2_big = jax.random.normal(kb[2], (Fb,), jnp.float32)
    dv1_big = jax.random.normal(kb[3], (Eb,), jnp.float32)
    dv2_big = jax.random.normal(kb[4], (Fb,), jnp.float32)
    u_big = jax.random.normal(kb[5], (Fb,), jnp.float32)
    f_big = jax.random.normal(kb[6], (Fb,), jnp.float32)
    phi_big = jax.random.normal(kb[7], (Fb,), jnp.float32)

    # tiled Hodge Laplacian (256x256 output tiles, 512-deep reduction chunks)
    K_big = pallas_hodge_laplacian_tiled(d1_big, b1_big, b2_big,
                                         dv1_big, dv2_big)
    jax.block_until_ready(K_big)

    # tiled residual + norm kernel
    r_big, nsq_big = pallas_residual_and_norm_tiled(K_big, u_big, f_big)
    jax.block_until_ready((r_big, nsq_big))

    # LU refinement path (factor once, residual kernel per iteration)
    lu_out = jax.jit(functools.partial(_ddec_refine_lu, iters=3, tol=1e-6))(
        K_big, f_big, phi_big)
    jax.block_until_ready(lu_out)

    print("KERNEL_OK")
</pallas_src>

<mosaic_0001>
module attributes {stable_mosaic.version = 11 : i64} {
  func.func @hodge_k_kernel(%arg0: memref<16x32xf32, #tpu.memory_space<vmem>>, %arg1: memref<1x32xf32, #tpu.memory_space<vmem>>, %arg2: memref<16x1xf32, #tpu.memory_space<vmem>>, %arg3: memref<1x32xf32, #tpu.memory_space<vmem>>, %arg4: memref<1x16xf32, #tpu.memory_space<vmem>>, %arg5: memref<16x16xf32, #tpu.memory_space<vmem>>) attributes {dimension_semantics = [], scalar_prefetch = 0 : i64, scratch_operands = 0 : i64, tpu.core_type = #tpu.core_type<tc>} {
    %c0 = arith.constant 0 : index
    %c0_0 = arith.constant 0 : index
    %0 = vector.load %arg0[%c0, %c0_0] : memref<16x32xf32, #tpu.memory_space<vmem>>, vector<16x32xf32>
    %c0_1 = arith.constant 0 : index
    %c0_2 = arith.constant 0 : index
    %1 = vector.load %arg1[%c0_1, %c0_2] : memref<1x32xf32, #tpu.memory_space<vmem>>, vector<1x32xf32>
    %2 = arith.mulf %1, %1 : vector<1x32xf32>
    %cst = arith.constant 9.99999974E-6 : f32
    %3 = vector.broadcast %cst : f32 to vector<1x32xf32>
    %4 = arith.addf %2, %3 : vector<1x32xf32>
    %c0_3 = arith.constant 0 : index
    %c0_4 = arith.constant 0 : index
    %5 = vector.load %arg3[%c0_3, %c0_4] : memref<1x32xf32, #tpu.memory_space<vmem>>, vector<1x32xf32>
    %6 = arith.mulf %5, %5 : vector<1x32xf32>
    %cst_5 = arith.constant 9.99999974E-6 : f32
    %7 = vector.broadcast %cst_5 : f32 to vector<1x32xf32>
    %8 = arith.addf %6, %7 : vector<1x32xf32>
    %9 = arith.mulf %4, %8 : vector<1x32xf32>
    %cst_6 = arith.constant 1.000000e+00 : f32
    %10 = vector.broadcast %cst_6 : f32 to vector<1x32xf32>
    %11 = arith.divf %10, %9 : vector<1x32xf32>
    %12 = vector.broadcast %11 : vector<1x32xf32> to vector<16x32xf32>
    %13 = arith.mulf %0, %12 : vector<16x32xf32>
    %cst_7 = arith.constant dense<0.000000e+00> : vector<16x16xf32>
    %14 = tpu.matmul %13, %0, %cst_7 {dimension_numbers = #tpu.dot_dimension_numbers<[1], [1], [0], [0], [0, 0, 1, 0], [], []>} : vector<16x32xf32>, vector<16x32xf32>, vector<16x16xf32> -> vector<16x16xf32>
    %15 = tpu.iota {dimensions = array<i32: 0>} : vector<16x16xi32>
    %16 = tpu.iota {dimensions = array<i32: 1>} : vector<16x16xi32>
    %17 = arith.cmpi eq, %15, %16 : vector<16x16xi32>
    %cst_8 = arith.constant 9.99999997E-7 : f32
    %cst_9 = arith.constant 0.000000e+00 : f32
    %18 = vector.broadcast %cst_8 : f32 to vector<16x16xf32>
    %19 = vector.broadcast %cst_9 : f32 to vector<16x16xf32>
    %20 = arith.select %17, %18, %19 : vector<16x16xi1>, vector<16x16xf32>
    %c0_10 = arith.constant 0 : index
    %c0_11 = arith.constant 0 : index
    %21 = vector.load %arg2[%c0_10, %c0_11] : memref<16x1xf32, #tpu.memory_space<vmem>>, vector<16x1xf32>
    %22 = arith.mulf %21, %21 : vector<16x1xf32>
    %23 = vector.broadcast %22 : vector<16x1xf32> to vector<16x16xf32>
    %24 = arith.mulf %23, %14 : vector<16x16xf32>
    %c0_12 = arith.constant 0 : index
    %c0_13 = arith.constant 0 : index
    %25 = vector.load %arg4[%c0_12, %c0_13] : memref<1x16xf32, #tpu.memory_space<vmem>>, vector<1x16xf32>
    %26 = arith.mulf %25, %25 : vector<1x16xf32>
    %27 = vector.broadcast %26 : vector<1x16xf32> to vector<16x16xf32>
    %28 = arith.mulf %24, %27 : vector<16x16xf32>
    %29 = arith.addf %28, %20 : vector<16x16xf32>
    %c0_14 = arith.constant 0 : index
    %c0_15 = arith.constant 0 : index
    %30 = vector.load %arg5[%c0_14, %c0_15] : memref<16x16xf32, #tpu.memory_space<vmem>>, vector<16x16xf32>
    tpu.vector_store %arg5[%c0_14, %c0_15], %29 {strides = array<i32>} : memref<16x16xf32, #tpu.memory_space<vmem>>, vector<16x16xf32>,
    return
  }
}

module attributes {stable_mosaic.version = 11 : i64} {
  func.func @ddec_refine_kernel(%arg0: memref<16x16xf32, #tpu.memory_space<vmem>>, %arg1: memref<16x16xf32, #tpu.memory_space<vmem>>, %arg2: memref<1x16xf32, #tpu.memory_space<vmem>>, %arg3: memref<1x16xf32, #tpu.memory_space<vmem>>, %arg4: memref<1x16xf32, #tpu.memory_space<vmem>>, %arg5: memref<1x16xf32, #tpu.memory_space<vmem>>, %arg6: memref<1xf32, #tpu.memory_space<smem>>) attributes {dimension_semantics = [], scalar_prefetch = 0 : i64, scratch_operands = 0 : i64, tpu.core_type = #tpu.core_type<tc>} {
    %c0 = arith.constant 0 : index
    %c0_0 = arith.constant 0 : index
    %0 = vector.load %arg0[%c0, %c0_0] : memref<16x16xf32, #tpu.memory_space<vmem>>, vector<16x16xf32>
    %c0_1 = arith.constant 0 : index
    %c0_2 = arith.constant 0 : index
    %1 = vector.load %arg1[%c0_1, %c0_2] : memref<16x16xf32, #tpu.memory_space<vmem>>, vector<16x16xf32>
    %c0_3 = arith.constant 0 : index
    %c0_4 = arith.constant 0 : index
    %2 = vector.load %arg2[%c0_3, %c0_4] : memref<1x16xf32, #tpu.memory_space<vmem>>, vector<1x16xf32>
    %cst = arith.constant dense<0.000000e+00> : vector<1x16xf32>
    %3 = tpu.matmul %2, %1, %cst {dimension_numbers = #tpu.dot_dimension_numbers<[1], [1], [0], [0], [0, 0, 1, 0], [], []>} : vector<1x16xf32>, vector<16x16xf32>, vector<1x16xf32> -> vector<1x16xf32>
    %cst_5 = arith.constant dense<0.000000e+00> : vector<1x16xf32>
    %4 = tpu.matmul %3, %0, %cst_5 {dimension_numbers = #tpu.dot_dimension_numbers<[1], [1], [0], [0], [0, 0, 1, 0], [], []>} : vector<1x16xf32>, vector<16x16xf32>, vector<1x16xf32> -> vector<1x16xf32>
    %5 = arith.subf %4, %2 : vector<1x16xf32>
    %cst_6 = arith.constant 9.99999997E-7 : f32
    %cst_7 = arith.constant 9.99999997E-7 : f32
    %6 = arith.mulf %cst_6, %cst_7 : f32
    %c0_i32 = arith.constant 0 : i32
    %7 = arith.mulf %5, %5 : vector<1x16xf32>
    %cst_8 = arith.constant dense<0.000000e+00> : vector<1xf32>
    %8 = vector.multi_reduction <add>, %7, %cst_8 [1] : vector<1x16xf32> to vector<1xf32>
    %9 = vector.shape_cast %8 : vector<1xf32> to vector<1x1xf32>
    %10 = vector.broadcast %6 : f32 to vector<1x1xf32>
    %11 = arith.cmpf olt, %9, %10 : vector<1x1xf32>
    %cst_9 = arith.constant dense<true> : vector<1x1xi1>
    %12 = arith.xori %11, %cst_9 : vector<1x1xi1>
    %cst_10 = arith.constant dense<0.000000e+00> : vector<1x16xf32>
    %13 = tpu.matmul %5, %1, %cst_10 {dimension_numbers = #tpu.dot_dimension_numbers<[1], [1], [0], [0], [0, 0, 1, 0], [], []>} : vector<1x16xf32>, vector<16x16xf32>, vector<1x16xf32> -> vector<1x16xf32>
    %14 = arith.subf %3, %13 : vector<1x16xf32>
    %15 = vector.shape_cast %12 : vector<1x1xi1> to vector<1x1xi1>
    %16 = vector.broadcast %15 : vector<1x1xi1> to vector<1x16xi1>
    %17 = arith.select %16, %14, %3 : vector<1x16xi1>, vector<1x16xf32>
    %cst_11 = arith.constant dense<0.000000e+00> : vector<1x16xf32>
    %18 = tpu.matmul %17, %0, %cst_11 {dimension_numbers = #tpu.dot_dimension_numbers<[1], [1], [0], [0], [0, 0, 1, 0], [], []>} : vector<1x16xf32>, vector<16x16xf32>, vector<1x16xf32> -> vector<1x16xf32>
    %19 = arith.subf %18, %2 : vector<1x16xf32>
    %20 = vector.shape_cast %12 : vector<1x1xi1> to vector<1x1xi1>
    %21 = vector.broadcast %20 : vector<1x1xi1> to vector<1x16xi1>
    %22 = arith.select %21, %19, %5 : vector<1x16xi1>, vector<1x16xf32>
    %c1_i32 = arith.constant 1 : i32
    %23 = arith.mulf %22, %22 : vector<1x16xf32>
    %cst_12 = arith.constant dense<0.000000e+00> : vector<1xf32>
    %24 = vector.multi_reduction <add>, %23, %cst_12 [1] : vector<1x16xf32> to vector<1xf32>
    %25 = vector.shape_cast %24 : vector<1xf32> to vector<1x1xf32>
    %26 = vector.broadcast %6 : f32 to vector<1x1xf32>
    %27 = arith.cmpf olt, %25, %26 : vector<1x1xf32>
    %cst_13 = arith.constant dense<true> : vector<1x1xi1>
    %28 = arith.xori %27, %cst_13 : vector<1x1xi1>
    %cst_14 = arith.constant dense<0.000000e+00> : vector<1x16xf32>
    %29 = tpu.matmul %22, %1, %cst_14 {dimension_numbers = #tpu.dot_dimension_numbers<[1], [1], [0], [0], [0, 0, 1, 0], [], []>} : vector<1x16xf32>, vector<16x16xf32>, vector<1x16xf32> -> vector<1x16xf32>
    %30 = arith.subf %17, %29 : vector<1x16xf32>
    %31 = vector.shape_cast %28 : vector<1x1xi1> to vector<1x1xi1>
    %32 = vector.broadcast %31 : vector<1x1xi1> to vector<1x16xi1>
    %33 = arith.select %32, %30, %17 : vector<1x16xi1>, vector<1x16xf32>
    %cst_15 = arith.constant dense<0.000000e+00> : vector<1x16xf32>
    %34 = tpu.matmul %33, %0, %cst_15 {dimension_numbers = #tpu.dot_dimension_numbers<[1], [1], [0], [0], [0, 0, 1, 0], [], []>} : vector<1x16xf32>, vector<16x16xf32>, vector<1x16xf32> -> vector<1x16xf32>
    %35 = arith.subf %34, %2 : vector<1x16xf32>
    %36 = vector.shape_cast %28 : vector<1x1xi1> to vector<1x1xi1>
    %37 = vector.broadcast %36 : vector<1x1xi1> to vector<1x16xi1>
    %38 = arith.select %37, %35, %22 : vector<1x16xi1>, vector<1x16xf32>
    %c2_i32 = arith.constant 2 : i32
    %39 = arith.mulf %38, %38 : vector<1x16xf32>
    %cst_16 = arith.constant dense<0.000000e+00> : vector<1xf32>
    %40 = vector.multi_reduction <add>, %39, %cst_16 [1] : vector<1x16xf32> to vector<1xf32>
    %41 = vector.shape_cast %40 : vector<1xf32> to vector<1x1xf32>
    %42 = vector.broadcast %6 : f32 to vector<1x1xf32>
    %43 = arith.cmpf olt, %41, %42 : vector<1x1xf32>
    %cst_17 = arith.constant dense<true> : vector<1x1xi1>
    %44 = arith.xori %43, %cst_17 : vector<1x1xi1>
    %cst_18 = arith.constant dense<0.000000e+00> : vector<1x16xf32>
    %45 = tpu.matmul %38, %1, %cst_18 {dimension_numbers = #tpu.dot_dimension_numbers<[1], [1], [0], [0], [0, 0, 1, 0], [], []>} : vector<1x16xf32>, vector<16x16xf32>, vector<1x16xf32> -> vector<1x16xf32>
    %46 = arith.subf %33, %45 : vector<1x16xf32>
    %47 = vector.shape_cast %44 : vector<1x1xi1> to vector<1x1xi1>
    %48 = vector.broadcast %47 : vector<1x1xi1> to vector<1x16xi1>
    %49 = arith.select %48, %46, %33 : vector<1x16xi1>, vector<1x16xf32>
    %cst_19 = arith.constant dense<0.000000e+00> : vector<1x16xf32>
    %50 = tpu.matmul %49, %0, %cst_19 {dimension_numbers = #tpu.dot_dimension_numbers<[1], [1], [0], [0], [0, 0, 1, 0], [], []>} : vector<1x16xf32>, vector<16x16xf32>, vector<1x16xf32> -> vector<1x16xf32>
    %51 = arith.subf %50, %2 : vector<1x16xf32>
    %52 = vector.shape_cast %44 : vector<1x1xi1> to vector<1x1xi1>
    %53 = vector.broadcast %52 : vector<1x1xi1> to vector<1x16xi1>
    %54 = arith.select %53, %51, %38 : vector<1x16xi1>, vector<1x16xf32>
    %c3_i32 = arith.constant 3 : i32
    %55 = arith.mulf %54, %54 : vector<1x16xf32>
    %cst_20 = arith.constant dense<0.000000e+00> : vector<1xf32>
    %56 = vector.multi_reduction <add>, %55, %cst_20 [1] : vector<1x16xf32> to vector<1xf32>
    %57 = vector.shape_cast %56 : vector<1xf32> to vector<1x1xf32>
    %58 = vector.broadcast %6 : f32 to vector<1x1xf32>
    %59 = arith.cmpf olt, %57, %58 : vector<1x1xf32>
    %cst_21 = arith.constant dense<true> : vector<1x1xi1>
    %60 = arith.xori %59, %cst_21 : vector<1x1xi1>
    %cst_22 = arith.constant dense<0.000000e+00> : vector<1x16xf32>
    %61 = tpu.matmul %54, %1, %cst_22 {dimension_numbers = #tpu.dot_dimension_numbers<[1], [1], [0], [0], [0, 0, 1, 0], [], []>} : vector<1x16xf32>, vector<16x16xf32>, vector<1x16xf32> -> vector<1x16xf32>
    %62 = arith.subf %49, %61 : vector<1x16xf32>
    %63 = vector.shape_cast %60 : vector<1x1xi1> to vector<1x1xi1>
    %64 = vector.broadcast %63 : vector<1x1xi1> to vector<1x16xi1>
    %65 = arith.select %64, %62, %49 : vector<1x16xi1>, vector<1x16xf32>
    %cst_23 = arith.constant dense<0.000000e+00> : vector<1x16xf32>
    %66 = tpu.matmul %65, %0, %cst_23 {dimension_numbers = #tpu.dot_dimension_numbers<[1], [1], [0], [0], [0, 0, 1, 0], [], []>} : vector<1x16xf32>, vector<16x16xf32>, vector<1x16xf32> -> vector<1x16xf32>
    %67 = arith.subf %66, %2 : vector<1x16xf32>
    %68 = vector.shape_cast %60 : vector<1x1xi1> to vector<1x1xi1>
    %69 = vector.broadcast %68 : vector<1x1xi1> to vector<1x16xi1>
    %70 = arith.select %69, %67, %54 : vector<1x16xi1>, vector<1x16xf32>
    %c4_i32 = arith.constant 4 : i32
    %71 = arith.mulf %70, %70 : vector<1x16xf32>
    %cst_24 = arith.constant dense<0.000000e+00> : vector<1xf32>
    %72 = vector.multi_reduction <add>, %71, %cst_24 [1] : vector<1x16xf32> to vector<1xf32>
    %73 = vector.shape_cast %72 : vector<1xf32> to vector<1x1xf32>
    %74 = vector.broadcast %6 : f32 to vector<1x1xf32>
    %75 = arith.cmpf olt, %73, %74 : vector<1x1xf32>
    %cst_25 = arith.constant dense<true> : vector<1x1xi1>
    %76 = arith.xori %75, %cst_25 : vector<1x1xi1>
    %cst_26 = arith.constant dense<0.000000e+00> : vector<1x16xf32>
    %77 = tpu.matmul %70, %1, %cst_26 {dimension_numbers = #tpu.dot_dimension_numbers<[1], [1], [0], [0], [0, 0, 1, 0], [], []>} : vector<1x16xf32>, vector<16x16xf32>, vector<1x16xf32> -> vector<1x16xf32>
    %78 = arith.subf %65, %77 : vector<1x16xf32>
    %79 = vector.shape_cast %76 : vector<1x1xi1> to vector<1x1xi1>
    %80 = vector.broadcast %79 : vector<1x1xi1> to vector<1x16xi1>
    %81 = arith.select %80, %78, %65 : vector<1x16xi1>, vector<1x16xf32>
    %cst_27 = arith.constant dense<0.000000e+00> : vector<1x16xf32>
    %82 = tpu.matmul %81, %0, %cst_27 {dimension_numbers = #tpu.dot_dimension_numbers<[1], [1], [0], [0], [0, 0, 1, 0], [], []>} : vector<1x16xf32>, vector<16x16xf32>, vector<1x16xf32> -> vector<1x16xf32>
    %83 = arith.subf %82, %2 : vector<1x16xf32>
    %84 = vector.shape_cast %76 : vector<1x1xi1> to vector<1x1xi1>
    %85 = vector.broadcast %84 : vector<1x1xi1> to vector<1x16xi1>
    %86 = arith.select %85, %83, %70 : vector<1x16xi1>, vector<1x16xf32>
    %c0_28 = arith.constant 0 : index
    %c0_29 = arith.constant 0 : index
    %87 = vector.load %arg3[%c0_28, %c0_29] : memref<1x16xf32, #tpu.memory_space<vmem>>, vector<1x16xf32>
    %88 = arith.subf %87, %81 : vector<1x16xf32>
    %cst_30 = arith.constant 2.000000e+00 : f32
    %89 = vector.broadcast %cst_30 : f32 to vector<1x16xf32>
    %90 = arith.mulf %89, %88 : vector<1x16xf32>
    %cst_31 = arith.constant dense<0.000000e+00> : vector<1x16xf32>
    %91 = tpu.matmul %90, %1, %cst_31 {dimension_numbers = #tpu.dot_dimension_numbers<[1], [0], [0], [1], [0, 0, 1, 1], [], []>} : vector<1x16xf32>, vector<16x16xf32>, vector<1x16xf32> -> vector<1x16xf32>
    %c0_32 = arith.constant 0 : index
    %c0_33 = arith.constant 0 : index
    %92 = vector.load %arg4[%c0_32, %c0_33] : memref<1x16xf32, #tpu.memory_space<vmem>>, vector<1x16xf32>
    tpu.vector_store %arg4[%c0_32, %c0_33], %81 {strides = array<i32>} : memref<1x16xf32, #tpu.memory_space<vmem>>, vector<1x16xf32>,
    %c0_34 = arith.constant 0 : index
    %c0_35 = arith.constant 0 : index
    %93 = vector.load %arg5[%c0_34, %c0_35] : memref<1x16xf32, #tpu.memory_space<vmem>>, vector<1x16xf32>
    tpu.vector_store %arg5[%c0_34, %c0_35], %91 {strides = array<i32>} : memref<1x16xf32, #tpu.memory_space<vmem>>, vector<1x16xf32>,
    %94 = arith.mulf %91, %86 : vector<1x16xf32>
    %95 = vector.shape_cast %94 : vector<1x16xf32> to vector<1x1x16xf32>
    %cst_36 = arith.constant dense<0.000000e+00> : vector<1xf32>
    %96 = vector.multi_reduction <add>, %95, %cst_36 [1, 2] : vector<1x1x16xf32> to vector<1xf32>
    %97 = vector.shape_cast %96 : vector<1xf32> to vector<1x1x1xf32>
    %98 = vector.extract %97[0, 0, 0] : f32 from vector<1x1x1xf32>
    %c0_37 = arith.constant 0 : index
    %99 = memref.load %arg6[%c0_37] : memref<1xf32, #tpu.memory_space<smem>>
    memref.store %98, %arg6[%c0_37] : memref<1xf32, #tpu.memory_space<smem>>
    return
  }
}

</mosaic_0001>

<llo_original>
// kernel: custom-call.11
$region0: #{custom-call.11}
  %s0 = inlined_call_operand.vmem [shape: f32[16,16], index: 0, kind: input, shape index: {}]
  %s1 = inlined_call_operand.vmem [shape: f32[16,16], index: 1, kind: output, shape index: {0}]
  %s2 = inlined_call_operand.hbm [shape: s32[16], index: 2, kind: output, shape index: {1}]
  %s3 = inlined_call_operand.vmem [shape: s32[16], index: 3, kind: output, shape index: {2}]
  %4 = xla_tuple %s1, %s2, %s3
  $region1: #{custom-call.11} parent=0
    #allocation0 [shape = 'u8[8192]{0}', space=vmem, size = 0x2000, scoped, tag = 'operand span for operand 0']
    #allocation1 [shape = 'u8[8192]{0}', space=vmem, size = 0x2000, scoped, tag = 'operand span for operand 1']
    #allocation2 [shape = 'u8[4096]{0}', space=vmem, size = 0x1000, scoped, tag = 'operand span for operand 2']
    #allocation3 [shape = 'u8[512]{0}', space=vmem, size = 0x400, scoped, tag = 'packed  for operand 2']
    #allocation4 [shape = 's32[1]{0}', space=sflag, size = 0x4, scoped, tag = 'scoped memory for custom-call.11']
    #allocation5 [shape = 'u8[4096]{0}', space=vmem, size = 0x1000, scoped, tag = 'operand span for operand 3']
    #allocation6 [shape = 'u8[512]{0}', space=vmem, size = 0x400, scoped, tag = 'packed  for operand 3']
    #allocation7 [shape = 's32[16,128]{1,0}', space=vmem, size = 0x2000, scoped, tag = 'scratch for permutations']
    %5 = vsyncpa [#allocation4], 0
    // Predicated region
    $region2: #{custom-call.11} parent=1 // pred_check
      _
    $region3: #{custom-call.11} parent=1 // pred_check_branch
      %7 = sbr.rel (0) target = $region5
    $region4: #{custom-call.11} parent=1 // pred_region
      %p9 = scmp.gt.s32.totalorder 2, 0
      // Predicated region
      $region6: #{custom-call.11} parent=4 // pred_check
        %p10 = pneg %p9
      $region7: #{custom-call.11} parent=4 // pred_check_branch
        %12 = sbr.rel (%p10) target = $region9
      $region8: #{custom-call.11} parent=4 // pred_region
        %s13 = ssub.s32 2, 1
        %s14 = smul.u32 %s13, 8
        %s15 = scalar_lea.vmem %s0, %s14
        %v16 = vld [vmem:[%s0] sm:$0xff]
        // While loop
        $region10: #{custom-call.11} parent=8 // loop_pre_header
          _
        $region11: #{custom-call.11} parent=8 // loop_header
          %s17 = sphi %s0, %s39
          %s18 = sphi [#allocation0], %s40
          %v19 = vphi %v16, %v41
          %s20 = ssub.s32 %s15, 64
          %p21 = scmp.gt.s32.totalorder %s17, %s20
        $region12: #{custom-call.11} parent=8 // loop_header_branch
          %23 = sbr.rel (%p21) target = $region16
        $region13: #{custom-call.11} parent=8 // loop_body
          %24 = vst [vmem:[%s18] sm:$0xff] %v19
          %v25 = vld [vmem:[%s17 + $0x8] sm:$0xff]
          %26 = vst [vmem:[%s18 + $0x8] sm:$0xff] %v25
          %v27 = vld [vmem:[%s17 + $0x10] sm:$0xff]
          %28 = vst [vmem:[%s18 + $0x10] sm:$0xff] %v27
          %v29 = vld [vmem:[%s17 + $0x18] sm:$0xff]
          %30 = vst [vmem:[%s18 + $0x18] sm:$0xff] %v29
          %v31 = vld [vmem:[%s17 + $0x20] sm:$0xff]
          %32 = vst [vmem:[%s18 + $0x20] sm:$0xff] %v31
          %v33 = vld [vmem:[%s17 + $0x28] sm:$0xff]
          %34 = vst [vmem:[%s18 + $0x28] sm:$0xff] %v33
          %v35 = vld [vmem:[%s17 + $0x30] sm:$0xff]
          %36 = vst [vmem:[%s18 + $0x30] sm:$0xff] %v35
          %v37 = vld [vmem:[%s17 + $0x38] sm:$0xff]
          %38 = vst [vmem:[%s18 + $0x38] sm:$0xff] %v37
        $region14: #{custom-call.11} parent=8 // loop_footer
          %s39 = scalar_lea.vmem %s17, 64
          %s40 = scalar_lea.vmem %s18, 64
          %v41 = vld [vmem:[%s17 + $0x40] sm:$0xff]
        $region15: #{custom-call.11} parent=8 // loop_footer_branch
          %42 = sbr.rel target = $region11
        $region16: #{custom-call.11} parent=8 // loop_exit
          _
        // While loop
        $region17: #{custom-call.11} parent=8 // loop_pre_header
          _
        $region18: #{custom-call.11} parent=8 // loop_header
          %s43 = sphi %s17, %s51
          %s44 = sphi %s18, %s52
          %v45 = vphi %v19, %v45
          %p46 = scmp.gt.s32.totalorder %s43, %s15
        $region19: #{custom-call.11} parent=8 // loop_header_branch
          %48 = sbr.rel (%p46) target = $region23
        $region20: #{custom-call.11} parent=8 // loop_body
          %v49 = vld [vmem:[%s43] sm:$0xff]
          %50 = vst [vmem:[%s44] sm:$0xff] %v49
        $region21: #{custom-call.11} parent=8 // loop_footer
          %s51 = scalar_lea.vmem %s43, 8
          %s52 = scalar_lea.vmem %s44, 8
        $region22: #{custom-call.11} parent=8 // loop_footer_branch
          %53 = sbr.rel target = $region18
        $region23: #{custom-call.11} parent=8 // loop_exit
          _
      $region9: #{custom-call.11} parent=4 // pred_fallthru
        _
      %s55 = ssub.s32 1, 1
      %s56 = smul.u32 2, 8
      %s57 = scalar_lea.vmem [#allocation0], %s56
      %s58 = smul.u32 2, 8
      %s59 = scalar_lea.vmem %s0, %s58
      %v60 = vld [vmem:[%s59] sm:%s55]
      %61 = vst [vmem:[%s57] sm:%s55] %v60
    $region5: #{custom-call.11} parent=1 // pred_fallthru
      _
    %v62 = vld [vmem:[#allocation0] sm:$0xff]
    %63 = vst [vmem:[#allocation1] sm:$0xff] %v62
    %s64 = scalar_lea.vmem [#allocation1], 8
    %s65 = scalar_lea.vmem [#allocation0], 8
    %v66 = vld [vmem:[%s65] sm:$0xff]
    %67 = vst [vmem:[%s64] sm:$0xff] %v66
    %68 = vst [vmem:[#allocation2] sm:$0x1] 0
    %v69 = vlaneseq
    %v70 = vshrl.u32 %v69, 7
    %v71 = vmov %v70
    loop: start=0, step=1, limit=2
    $region24: #{custom-call.11} parent=1 // loop_pre_header
      _
    $region25: #{custom-call.11} parent=1 // loop_header
      %s73 = sphi 0, %s77
      %p74 = scmp.ge.s32.totalorder %s73, 2
    $region26: #{custom-call.11} parent=1 // loop_header_branch
      %76 = sbr.rel (%p74) target = $region30
    $region27: #{custom-call.11} parent=1 // loop_body
      %s78 = smul.addr %s73, 8
      %s79 = scalar_lea.vmem [#allocation7], %s78
      %s80 = smul.u32 %s73, 8
      %v81 = vstv %s80
      %v82 = vadd.s32 %v71, %v81
      %83 = vst [vmem:[%s79] sm:$0xff] %v82
    $region28: #{custom-call.11} parent=1 // loop_footer
      %s77 = sadd.s32 1, %s73
    $region29: #{custom-call.11} parent=1 // loop_footer_branch
      %72 = sbr.rel target = $region25
    $region30: #{custom-call.11} parent=1 // loop_exit
      _
    loop: start=0, step=1, limit=16
    $region31: #{custom-call.11} parent=1 // loop_pre_header
      _
    $region32: #{custom-call.11} parent=1 // loop_header
      %s85 = sphi 0, %s89
      %p86 = scmp.ge.s32.totalorder %s85, 16
    $region33: #{custom-call.11} parent=1 // loop_header_branch
      %88 = sbr.rel (%p86) target = $region37
    $region34: #{custom-call.11} parent=1 // loop_body
      %v90 = vstv %s85
      %v91 = vlaneseq
      %v92 = vshrl.u32 %v91, 7
      %v93 = vmov %v92
      %v94 = vld [vmem:[#allocation1] sm:$0xff]
      %v95 = vand.u32 2147483647, %v94
      %v97 = vstv %s85
      %vm98 = vcmp.ge.s32.totalorder %v93, %v97
      %vm99 = vcmp.lt.s32.totalorder %v93, 16
      %vm100 = vmand %vm98, %vm99
      %vm101 = vcmp.lt.f32.partialorder -inf, %v95
      %vm102 = vmand %vm100, %vm101
      %v103 = vsel %vm102, %v93, %v90
      %v104 = vsel %vm102, %v95, -inf
      %s105 = scalar_lea.vmem [#allocation1], 8
      %v106 = vld [vmem:[%s105] sm:$0xff]
      %v107 = vand.u32 2147483647, %v106
      %v108 = vadd.s32 %v93, 8
      %v109 = vstv %s85
      %vm110 = vcmp.ge.s32.totalorder %v108, %v109
      %vm111 = vcmp.lt.s32.totalorder %v108, 16
      %vm112 = vmand %vm110, %vm111
      %vm113 = vcmp.lt.f32.partialorder %v104, %v107
      %vm114 = vmand %vm112, %vm113
      %v115 = vsel %vm114, %v108, %v103
      %v116 = vsel %vm114, %v107, %v104
      %v117 = vrot.slane %v116, 1
      %v118 = vrot.slane %v115, 1
      %vm119 = vcmp.ge.f32.partialorder %v117, %v116
      %v120 = vsel %vm119, %v117, %v116
      %v121 = vsel %vm119, %v118, %v115
      %v122 = vrot.slane %v117, 1
      %v123 = vrot.slane %v118, 1
      %vm124 = vcmp.ge.f32.partialorder %v122, %v120
      %v125 = vsel %vm124, %v122, %v120
      %v126 = vsel %vm124, %v123, %v121
      %v127 = vrot.slane %v122, 1
      %v128 = vrot.slane %v123, 1
      %vm129 = vcmp.ge.f32.partialorder %v127, %v125
      %v130 = vsel %vm129, %v127, %v125
      %v131 = vsel %vm129, %v128, %v126
      %v132 = vrot.slane %v127, 1
      %v133 = vrot.slane %v128, 1
      %vm134 = vcmp.ge.f32.partialorder %v132, %v130
      %v135 = vsel %vm134, %v132, %v130
      %v136 = vsel %vm134, %v133, %v131
      %v137 = vrot.slane %v132, 1
      %v138 = vrot.slane %v133, 1
      %vm139 = vcmp.ge.f32.partialorder %v137, %v135
      %v140 = vsel %vm139, %v137, %v135
      %v141 = vsel %vm139, %v138, %v136
      %v142 = vrot.slane %v137, 1
      %v143 = vrot.slane %v138, 1
      %vm144 = vcmp.ge.f32.partialorder %v142, %v140
      %v145 = vsel %vm144, %v142, %v140
      %v146 = vsel %vm144, %v143, %v141
      %v147 = vrot.slane %v142, 1
      %v148 = vrot.slane %v143, 1
      %vm149 = vcmp.ge.f32.partialorder %v147, %v145
      %v150 = vsel %vm149, %v147, %v145
      %v151 = vsel %vm149, %v148, %v146
      %s152 = ssub.s32 128, %s85
      %153 = vrot.lane.b32.xlu0 %v151, %s152
      %v154 = vpop.permute.xlu0 %153
      %s155 = vtos %v154
      %v156 = vstv %s85
      %v157 = vlaneseq
      %v158 = vand.u32 %v157, 127
      %vm159 = vcmp.eq.s32.totalorder %v158, %v156
      %v160 = vstv %s155
      %v161 = vld [vmem:[#allocation2] ss:$0 sm:$0xff]
      %v162 = vsel %vm159, %v160, %v161
      %163 = vst [vmem:[#allocation2] sm:$0x1] %v162
      %s164 = scalar_lea.vmem [#allocation1], %s85
      %s165 = scalar_lea.vmem [#allocation1], %s155
      %v166 = vld [vmem:[%s164] ss:$0 sm:$0xff]
      %v167 = vld [vmem:[%s165] ss:$0 sm:$0xff]
      %168 = vst [vmem:[%s165] sm:$0x1] %v166
      %169 = vst [vmem:[%s164] sm:$0x1] %v167
      %s170 = scalar_lea.vmem [#allocation7], %s85
      %s171 = scalar_lea.vmem [#allocation7], %s155
      %v172 = vld [vmem:[%s170] ss:$0 sm:$0xff]
      %v173 = vld [vmem:[%s171] ss:$0 sm:$0xff]
      %174 = vst [vmem:[%s171] sm:$0x1] %v172
      %175 = vst [vmem:[%s170] sm:$0x1] %v173
      %vm176 = vcmp.ne.f32.partialorder %v167, 0.0
      %vm177 = vmand %vm159, %vm176
      %v178 = vsel %vm177, %v167, 1.0
      %v179 = vlaneseq
      %v180 = vand.u32 %v179, 127
      %v181 = vstv %s85
      %vm182 = vcmp.gt.s32.totalorder %v180, %v181
      %v183 = vsel %vm182, %v167, 0.0
      %v184 = vlaneseq
      %v185 = vshrl.u32 %v184, 7
      %v186 = vmov %v185
      %v187 = vld [vmem:[#allocation1] sm:$0xff]
      %v189 = vstv %s85
      %vm190 = vcmp.gt.s32.totalorder %v186, %v189
      %v191 = vsel %vm190, %v178, 1.0
      %v192 = vrcp.pop %v191
      %v193 = vmul.f32 %v191, %v192
      %v194 = vsub.f32 1.0, %v193
      %v195 = vmul.f32 %v192, %v194
      %v196 = vadd.f32 %v192, %v195
      %vm197 = vweird.f32 %v191
      %vm198 = vweird.f32 %v192
      %vm199 = vmor %vm197, %vm198
      %v200 = vsel %vm199, %v192, %v196
      %v201 = vand.u32 2147483647, %v191
      %vm202 = vcmp.eq.f32.partialorder %v201, 8.507059e+37
      %v203 = vand.u32 %v191, 2147483648
      %v204 = vor.u32 1.1754944e-38, %v203
      %v205 = vsel %vm202, %v204, %v200
      %v206 = vmul.f32 %v187, %v205
      %vm207 = vmand %vm190, %vm159
      %v208 = vsel %vm207, %v206, 0.0
      %209 = vadd.xlane.f32.xlu0 %v208
      %v210 = vpop.xlane.xlu0 %209
      %v211 = vmul.f32 %v210, %v183
      %v212 = vsub.f32 %v206, %v211
      %213 = vst [vmem:[#allocation1] sm:$0xff] %v212
      %s214 = scalar_lea.vmem [#allocation1], 8
      %v215 = vld [vmem:[%s214] sm:$0xff]
      %v216 = vadd.s32 %v186, 8
      %v217 = vstv %s85
      %vm218 = vcmp.gt.s32.totalorder %v216, %v217
      %v219 = vsel %vm218, %v178, 1.0
      %v220 = vrcp.pop %v219
      %v221 = vmul.f32 %v219, %v220
      %v222 = vsub.f32 1.0, %v221
      %v223 = vmul.f32 %v220, %v222
      %v224 = vadd.f32 %v220, %v223
      %vm225 = vweird.f32 %v219
      %vm226 = vweird.f32 %v220
      %vm227 = vmor %vm225, %vm226
      %v228 = vsel %vm227, %v220, %v224
      %v229 = vand.u32 2147483647, %v219
      %vm230 = vcmp.eq.f32.partialorder %v229, 8.507059e+37
      %v231 = vand.u32 %v219, 2147483648
      %v232 = vor.u32 1.1754944e-38, %v231
      %v233 = vsel %vm230, %v232, %v228
      %v234 = vmul.f32 %v215, %v233
      %vm235 = vmand %vm218, %vm159
      %v236 = vsel %vm235, %v234, 0.0
      %237 = vadd.xlane.f32.xlu0 %v236
      %v238 = vpop.xlane.xlu0 %237
      %v239 = vmul.f32 %v238, %v183
      %v240 = vsub.f32 %v234, %v239
      %241 = vst [vmem:[%s214] sm:$0xff] %v240
    $region35: #{custom-call.11} parent=1 // loop_footer
      %s89 = sadd.s32 1, %s85
    $region36: #{custom-call.11} parent=1 // loop_footer_branch
      %84 = sbr.rel target = $region32
    $region37: #{custom-call.11} parent=1 // loop_exit
      _
    %v242 = vld [vmem:[#allocation7] sm:$0xff]
    %s243 = scalar_lea.vmem [#allocation7], 8
    %v244 = vld [vmem:[%s243] sm:$0xff]
    %s245 = scalar_lea.vmem [#allocation7], 16
    %s246 = scalar_lea.vmem [#allocation7], 24
    %s247 = scalar_lea.vmem [#allocation7], 32
    %s248 = scalar_lea.vmem [#allocation7], 40
    %s249 = scalar_lea.vmem [#allocation7], 48
    %s250 = scalar_lea.vmem [#allocation7], 56
    %s251 = scalar_lea.vmem [#allocation7], 64
    %s252 = scalar_lea.vmem [#allocation7], 72
    %s253 = scalar_lea.vmem [#allocation7], 80
    %s254 = scalar_lea.vmem [#allocation7], 88
    %s255 = scalar_lea.vmem [#allocation7], 96
    %s256 = scalar_lea.vmem [#allocation7], 104
    %s257 = scalar_lea.vmem [#allocation7], 112
    %s258 = scalar_lea.vmem [#allocation7], 120
    %259 = vxpose.xlu0.b32.start [1/16] %v242, 128
    %260 = vxpose.xlu0.b32.cont [2/16] %v244, 128
    %261 = vxpose.xlu0.b32.cont [3/16] 0, 128
    %262 = vxpose.xlu0.b32.cont [4/16] 0, 128
    %263 = vxpose.xlu0.b32.cont [5/16] 0, 128
    %264 = vxpose.xlu0.b32.cont [6/16] 0, 128
    %265 = vxpose.xlu0.b32.cont [7/16] 0, 128
    %266 = vxpose.xlu0.b32.cont [8/16] 0, 128
    %267 = vxpose.xlu0.b32.cont [9/16] 0, 128
    %268 = vxpose.xlu0.b32.cont [10/16] 0, 128
    %269 = vxpose.xlu0.b32.cont [11/16] 0, 128
    %270 = vxpose.xlu0.b32.cont [12/16] 0, 128
    %271 = vxpose.xlu0.b32.cont [13/16] 0, 128
    %272 = vxpose.xlu0.b32.cont [14/16] 0, 128
    %273 = vxpose.xlu0.b32.cont [15/16] 0, 128
    %274 = vxpose.xlu0.b32.end [16/16] 0, 128
    %v275 = vpop.trf.xlu0
    %v276 = vpop.trf.xlu0
    %v277 = vpop.trf.xlu0
    %v278 = vpop.trf.xlu0
    %v279 = vpop.trf.xlu0
    %v280 = vpop.trf.xlu0
    %v281 = vpop.trf.xlu0
    %v282 = vpop.trf.xlu0
    %v283 = vpop.trf.xlu0
    %v284 = vpop.trf.xlu0
    %v285 = vpop.trf.xlu0
    %v286 = vpop.trf.xlu0
    %v287 = vpop.trf.xlu0
    %v288 = vpop.trf.xlu0
    %v289 = vpop.trf.xlu0
    %v290 = vpop.trf.xlu0
    %291 = vst [vmem:[#allocation5] sm:$0x1] %v275
    %s293 = ssub.s32 2, 1
    %v294 = vld [vmem:[#allocation2] sm:%s293]
    %s296 = ssub.s32 2, 1
    %297 = vst [vmem:[#allocation3] sm:%s296] %v294
    %s299 = ssub.s32 2, 1
    %v300 = vld [vmem:[#allocation5] sm:%s299]
    %s302 = ssub.s32 2, 1
    %303 = vst [vmem:[#allocation6] sm:%s302] %v300
    // Predicated region
    $region38: #{custom-call.11} parent=1 // pred_check
      _
    $region39: #{custom-call.11} parent=1 // pred_check_branch
      %305 = sbr.rel (0) target = $region41
    $region40: #{custom-call.11} parent=1 // pred_region
      %p307 = scmp.gt.s32.totalorder 2, 0
      // Predicated region
      $region42: #{custom-call.11} parent=40 // pred_check
        %p308 = pneg %p307
      $region43: #{custom-call.11} parent=40 // pred_check_branch
        %310 = sbr.rel (%p308) target = $region45
      $region44: #{custom-call.11} parent=40 // pred_region
        %s311 = ssub.s32 2, 1
        %s312 = smul.u32 %s311, 8
        %s313 = scalar_lea.vmem [#allocation1], %s312
        %v314 = vld [vmem:[#allocation1] sm:$0xff]
        // While loop
        $region46: #{custom-call.11} parent=44 // loop_pre_header
          _
        $region47: #{custom-call.11} parent=44 // loop_header
          %s315 = sphi [#allocation1], %s337
          %s316 = sphi %s1, %s338
          %v317 = vphi %v314, %v339
          %s318 = ssub.s32 %s313, 64
          %p319 = scmp.gt.s32.totalorder %s315, %s318
        $region48: #{custom-call.11} parent=44 // loop_header_branch
          %321 = sbr.rel (%p319) target = $region52
        $region49: #{custom-call.11} parent=44 // loop_body
          %322 = vst [vmem:[%s316] sm:$0xff] %v317
          %v323 = vld [vmem:[%s315 + $0x8] sm:$0xff]
          %324 = vst [vmem:[%s316 + $0x8] sm:$0xff] %v323
          %v325 = vld [vmem:[%s315 + $0x10] sm:$0xff]
          %326 = vst [vmem:[%s316 + $0x10] sm:$0xff] %v325
          %v327 = vld [vmem:[%s315 + $0x18] sm:$0xff]
          %328 = vst [vmem:[%s316 + $0x18] sm:$0xff] %v327
          %v329 = vld [vmem:[%s315 + $0x20] sm:$0xff]
          %330 = vst [vmem:[%s316 + $0x20] sm:$0xff] %v329
          %v331 = vld [vmem:[%s315 + $0x28] sm:$0xff]
          %332 = vst [vmem:[%s316 + $0x28] sm:$0xff] %v331
          %v333 = vld [vmem:[%s315 + $0x30] sm:$0xff]
          %334 = vst [vmem:[%s316 + $0x30] sm:$0xff] %v333
          %v335 = vld [vmem:[%s315 + $0x38] sm:$0xff]
          %336 = vst [vmem:[%s316 + $0x38] sm:$0xff] %v335
        $region50: #{custom-call.11} parent=44 // loop_footer
          %s337 = scalar_lea.vmem %s315, 64
          %s338 = scalar_lea.vmem %s316, 64
          %v339 = vld [vmem:[%s315 + $0x40] sm:$0xff]
        $region51: #{custom-call.11} parent=44 // loop_footer_branch
          %340 = sbr.rel target = $region47
        $region52: #{custom-call.11} parent=44 // loop_exit
          _
        // While loop
        $region53: #{custom-call.11} parent=44 // loop_pre_header
          _
        $region54: #{custom-call.11} parent=44 // loop_header
          %s341 = sphi %s315, %s349
          %s342 = sphi %s316, %s350
          %v343 = vphi %v317, %v343
          %p344 = scmp.gt.s32.totalorder %s341, %s313
        $region55: #{custom-call.11} parent=44 // loop_header_branch
          %346 = sbr.rel (%p344) target = $region59
        $region56: #{custom-call.11} parent=44 // loop_body
          %v347 = vld [vmem:[%s341] sm:$0xff]
          %348 = vst [vmem:[%s342] sm:$0xff] %v347
        $region57: #{custom-call.11} parent=44 // loop_footer
          %s349 = scalar_lea.vmem %s341, 8
          %s350 = scalar_lea.vmem %s342, 8
        $region58: #{custom-call.11} parent=44 // loop_footer_branch
          %351 = sbr.rel target = $region54
        $region59: #{custom-call.11} parent=44 // loop_exit
          _
      $region45: #{custom-call.11} parent=40 // pred_fallthru
        _
      %s353 = ssub.s32 1, 1
      %s354 = smul.u32 2, 8
      %s355 = scalar_lea.vmem %s1, %s354
      %s356 = smul.u32 2, 8
      %s357 = scalar_lea.vmem [#allocation1], %s356
      %v358 = vld [vmem:[%s357] sm:%s353]
      %359 = vst [vmem:[%s355] sm:%s353] %v358
    $region41: #{custom-call.11} parent=1 // pred_fallthru
      _
    // Predicated region
    $region60: #{custom-call.11} parent=1 // pred_check
      _
    $region61: #{custom-call.11} parent=1 // pred_check_branch
      %361 = sbr.rel (0) target = $region63
    $region62: #{custom-call.11} parent=1 // pred_region
      %363 = vsyncadd [#allocation4], 0
      %s365 = sshll.u32 [#allocation3], 4
      %s366 = int_to_ptr.vmem [resolvable:$true] %s365
      %s367 = sshll.u32 %s2, 4
      %s368 = int_to_ptr.hbm [resolvable:$true] %s367
      %370 = dma.vmem_to_hbm [thread:$0]  %s366, 16, %s368, [#allocation4]
    $region63: #{custom-call.11} parent=1 // pred_fallthru
      _
    // Predicated region
    $region64: #{custom-call.11} parent=1 // pred_check
      _
    $region65: #{custom-call.11} parent=1 // pred_check_branch
      %372 = sbr.rel (0) target = $region67
    $region66: #{custom-call.11} parent=1 // pred_region
      // Predicated region
      $region68: #{custom-call.11} parent=66 // pred_check
        _
      $region69: #{custom-call.11} parent=66 // pred_check_branch
        %374 = sbr.rel (0) target = $region71
      $region70: #{custom-call.11} parent=66 // pred_region
        %p376 = scmp.gt.s32.totalorder 0, 0
        // Predicated region
        $region72: #{custom-call.11} parent=70 // pred_check
          %p377 = pneg %p376
        $region73: #{custom-call.11} parent=70 // pred_check_branch
          %379 = sbr.rel (%p377) target = $region75
        $region74: #{custom-call.11} parent=70 // pred_region
          %s380 = ssub.s32 0, 1
          %s381 = smul.u32 %s380, 8
          %s382 = scalar_lea.vmem [#allocation6], %s381
          %v383 = vld [vmem:[#allocation6] sm:$0xff]
          // While loop
          $region76: #{custom-call.11} parent=74 // loop_pre_header
            _
          $region77: #{custom-call.11} parent=74 // loop_header
            %s384 = sphi [#allocation6], %s406
            %s385 = sphi %s3, %s407
            %v386 = vphi %v383, %v408
            %s387 = ssub.s32 %s382, 64
            %p388 = scmp.gt.s32.totalorder %s384, %s387
          $region78: #{custom-call.11} parent=74 // loop_header_branch
            %390 = sbr.rel (%p388) target = $region82
          $region79: #{custom-call.11} parent=74 // loop_body
            %391 = vst [vmem:[%s385] sm:$0xff] %v386
            %v392 = vld [vmem:[%s384 + $0x8] sm:$0xff]
            %393 = vst [vmem:[%s385 + $0x8] sm:$0xff] %v392
            %v394 = vld [vmem:[%s384 + $0x10] sm:$0xff]
            %395 = vst [vmem:[%s385 + $0x10] sm:$0xff] %v394
            %v396 = vld [vmem:[%s384 + $0x18] sm:$0xff]
            %397 = vst [vmem:[%s385 + $0x18] sm:$0xff] %v396
            %v398 = vld [vmem:[%s384 + $0x20] sm:$0xff]
            %399 = vst [vmem:[%s385 + $0x20] sm:$0xff] %v398
            %v400 = vld [vmem:[%s384 + $0x28] sm:$0xff]
            %401 = vst [vmem:[%s385 + $0x28] sm:$0xff] %v400
            %v402 = vld [vmem:[%s384 + $0x30] sm:$0xff]
            %403 = vst [vmem:[%s385 + $0x30] sm:$0xff] %v402
            %v404 = vld [vmem:[%s384 + $0x38] sm:$0xff]
            %405 = vst [vmem:[%s385 + $0x38] sm:$0xff] %v404
          $region80: #{custom-call.11} parent=74 // loop_footer
            %s406 = scalar_lea.vmem %s384, 64
            %s407 = scalar_lea.vmem %s385, 64
            %v408 = vld [vmem:[%s384 + $0x40] sm:$0xff]
          $region81: #{custom-call.11} parent=74 // loop_footer_branch
            %409 = sbr.rel target = $region77
          $region82: #{custom-call.11} parent=74 // loop_exit
            _
          // While loop
          $region83: #{custom-call.11} parent=74 // loop_pre_header
            _
          $region84: #{custom-call.11} parent=74 // loop_header
            %s410 = sphi %s384, %s418
            %s411 = sphi %s385, %s419
            %v412 = vphi %v386, %v412
            %p413 = scmp.gt.s32.totalorder %s410, %s382
          $region85: #{custom-call.11} parent=74 // loop_header_branch
            %415 = sbr.rel (%p413) target = $region89
          $region86: #{custom-call.11} parent=74 // loop_body
            %v416 = vld [vmem:[%s410] sm:$0xff]
            %417 = vst [vmem:[%s411] sm:$0xff] %v416
          $region87: #{custom-call.11} parent=74 // loop_footer
            %s418 = scalar_lea.vmem %s410, 8
            %s419 = scalar_lea.vmem %s411, 8
          $region88: #{custom-call.11} parent=74 // loop_footer_branch
            %420 = sbr.rel target = $region84
          $region89: #{custom-call.11} parent=74 // loop_exit
            _
        $region75: #{custom-call.11} parent=70 // pred_fallthru
          _
        %s422 = ssub.s32 2, 1
        %s423 = smul.u32 0, 8
        %s424 = scalar_lea.vmem %s3, %s423
        %s425 = smul.u32 0, 8
        %s426 = scalar_lea.vmem [#allocation6], %s425
        %v427 = vld [vmem:[%s426] sm:%s422]
        %428 = vst [vmem:[%s424] sm:%s422] %v427
      $region71: #{custom-call.11} parent=66 // pred_fallthru
        _
    $region67: #{custom-call.11} parent=1 // pred_fallthru
      _
    // Predicated region
    $region90: #{custom-call.11} parent=1 // pred_check
      _
    $region91: #{custom-call.11} parent=1 // pred_check_branch
      %430 = sbr.rel (0) target = $region93
    $region92: #{custom-call.11} parent=1 // pred_region
      %432 = dma.done [#allocation4], 16
    $region93: #{custom-call.11} parent=1 // pred_fallthru
      _
    // Predicated region
    $region94: #{custom-call.11} parent=1 // pred_check
      _
    $region95: #{custom-call.11} parent=1 // pred_check_branch
      %434 = sbr.rel (0) target = $region97
    $region96: #{custom-call.11} parent=1 // pred_region
      _
    $region97: #{custom-call.11} parent=1 // pred_fallthru
      _
    %435 = vsyncpa [#allocation4], 1

// kernel: custom-call.13
$region0: #{custom-call.13}
  %s0 = inlined_call_operand.vmem [shape: f32[1,16,16], index: 0, kind: input, shape index: {}]
  %s1 = inlined_call_operand.vmem [shape: f32[1,16,16], index: 1, kind: output, shape index: {}]
  $region1: #{custom-call.13} parent=0
    #allocation0 [shape = 'u8[8192]{0}', space=vmem, size = 0x2000, scoped, tag = 'operand span for operand 0']
    #allocation1 [shape = 'u8[8192]{0}', space=vmem, size = 0x2000, scoped, tag = 'operand span for operand 1']
    #allocation2 [shape = 'f32[16,16]{1,0}', space=vmem, size = 0x2000, scoped, tag = 'rescaled input a']
    // Predicated region
    $region2: #{custom-call.13} parent=1 // pred_check
      _
    $region3: #{custom-call.13} parent=1 // pred_check_branch
      %3 = sbr.rel (0) target = $region5
    $region4: #{custom-call.13} parent=1 // pred_region
      // Predicated region
      $region6: #{custom-call.13} parent=4 // pred_check
        _
      $region7: #{custom-call.13} parent=4 // pred_check_branch
        %5 = sbr.rel (0) target = $region9
      $region8: #{custom-call.13} parent=4 // pred_region
        // Predicated region
        $region21: #{custom-call.13} parent=8 // pred_check
          _
        $region22: #{custom-call.13} parent=8 // pred_check_branch
          %23 = sbr.rel (0) target = $region24
        $region23: #{custom-call.13} parent=8 // pred_region
          loop: start=0, step=1, limit=1
          $region25: #{custom-call.13} parent=23 // loop_pre_header
            _
          $region26: #{custom-call.13} parent=23 // loop_header
            %s25 = sphi 0, %s29
            %p26 = scmp.ge.s32.totalorder %s25, 1
            %s30 = sphi %s0, %s0
            %s31 = sphi [#allocation0], [#allocation0]
          $region27: #{custom-call.13} parent=23 // loop_header_branch
            %28 = sbr.rel (%p26) target = $region31
          $region28: #{custom-call.13} parent=23 // loop_body
            %v32 = vld [vmem:[%s30] sm:$0xff]
            %33 = vst [vmem:[%s31] sm:$0xff] %v32
            %v34 = vld [vmem:[%s30 + $0x8] sm:$0xff]
            %35 = vst [vmem:[%s31 + $0x8] sm:$0xff] %v34
          $region29: #{custom-call.13} parent=23 // loop_footer
            %s29 = sadd.s32 1, %s25
          $region30: #{custom-call.13} parent=23 // loop_footer_branch
            %24 = sbr.rel target = $region26
          $region31: #{custom-call.13} parent=23 // loop_exit
            _
        $region24: #{custom-call.13} parent=8 // pred_fallthru
          _
        // Predicated region
        $region32: #{custom-call.13} parent=8 // pred_check
          _
        $region33: #{custom-call.13} parent=8 // pred_check_branch
          %37 = sbr.rel target = $region35
        $region34: #{custom-call.13} parent=8 // pred_region
          _
        $region35: #{custom-call.13} parent=8 // pred_fallthru
          _
      $region9: #{custom-call.13} parent=4 // pred_fallthru
        _
      // Predicated region
      $region10: #{custom-call.13} parent=4 // pred_check
        _
      $region11: #{custom-call.13} parent=4 // pred_check_branch
        %7 = sbr.rel target = $region13
      $region12: #{custom-call.13} parent=4 // pred_region
        %s9 = ssub.s32 256, 1
        loop: start=0, step=1, limit=1
        $region14: #{custom-call.13} parent=12 // loop_pre_header
          _
        $region15: #{custom-call.13} parent=12 // loop_header
          %s11 = sphi 0, %s15
          %p12 = scmp.ge.s32.totalorder %s11, 1
          %s16 = sphi %s0, %s0
          %s17 = sphi [#allocation0], [#allocation0]
        $region16: #{custom-call.13} parent=12 // loop_header_branch
          %14 = sbr.rel (%p12) target = $region20
        $region17: #{custom-call.13} parent=12 // loop_body
          %v18 = vld [vmem:[%s16] sm:%s9]
          %19 = vst [vmem:[%s17] sm:%s9] %v18
          %v20 = vld [vmem:[%s16 + $0x8] sm:%s9]
          %21 = vst [vmem:[%s17 + $0x8] sm:%s9] %v20
        $region18: #{custom-call.13} parent=12 // loop_footer
          %s15 = sadd.s32 1, %s11
        $region19: #{custom-call.13} parent=12 // loop_footer_branch
          %10 = sbr.rel target = $region15
        $region20: #{custom-call.13} parent=12 // loop_exit
          _
      $region13: #{custom-call.13} parent=4 // pred_fallthru
        _
    $region5: #{custom-call.13} parent=1 // pred_fallthru
      _
    %38 = vnop
    %v39 = vlaneseq
    %v40 = vand.u32 %v39, 127
    %vm41 = vcmp.lt.s32.totalorder %v40, 16
    %v42 = vlaneseq
    %v43 = vshrl.u32 %v42, 7
    %vm45 = vcmp.eq.s32.totalorder %v43, %v40
    %v46 = vld [vmem:[#allocation0] sm:$0xff]
    %v47 = vsel %vm45, %v46, 0.0
    %48 = vadd.xlane.f32.xlu0 %v47
    %v49 = vpop.xlane.xlu0 %48
    %vm50 = vcmp.ge.s32.totalorder %v43, %v40
    %vm51 = vmand %vm50, %vm41
    %v52 = vsel %vm51, %v46, 0.0
    %v53 = vrcp.pop %v49
    %v54 = vmul.f32 %v49, %v53
    %v55 = vsub.f32 1.0, %v54
    %v56 = vmul.f32 %v53, %v55
    %v57 = vadd.f32 %v53, %v56
    %vm58 = vweird.f32 %v49
    %vm59 = vweird.f32 %v53
    %vm60 = vmor %vm58, %vm59
    %v61 = vsel %vm60, %v53, %v57
    %v62 = vand.u32 2147483647, %v49
    %vm63 = vcmp.eq.f32.partialorder %v62, 8.507059e+37
    %v64 = vand.u32 %v49, 2147483648
    %v65 = vor.u32 1.1754944e-38, %v64
    %v66 = vsel %vm63, %v65, %v61
    %v67 = vmul.f32 %v52, %v66
    %68 = vst [vmem:[#allocation2] sm:$0xff] %v67
    %s69 = scalar_lea.vmem [#allocation0], 8
    %s70 = scalar_lea.vmem [#allocation2], 8
    %v71 = vlaneseq
    %v72 = vshrl.u32 %v71, 7
    %v73 = vadd.s32 %v72, 8
    %vm74 = vcmp.eq.s32.totalorder %v73, %v40
    %v75 = vld [vmem:[%s69] sm:$0xff]
    %v76 = vsel %vm74, %v75, 0.0
    %77 = vadd.xlane.f32.xlu0 %v76
    %v78 = vpop.xlane.xlu0 %77
    %vm79 = vcmp.ge.s32.totalorder %v73, %v40
    %vm80 = vmand %vm79, %vm41
    %v81 = vsel %vm80, %v75, 0.0
    %v82 = vrcp.pop %v78
    %v83 = vmul.f32 %v78, %v82
    %v84 = vsub.f32 1.0, %v83
    %v85 = vmul.f32 %v82, %v84
    %v86 = vadd.f32 %v82, %v85
    %vm87 = vweird.f32 %v78
    %vm88 = vweird.f32 %v82
    %vm89 = vmor %vm87, %vm88
    %v90 = vsel %vm89, %v82, %v86
    %v91 = vand.u32 2147483647, %v78
    %vm92 = vcmp.eq.f32.partialorder %v91, 8.507059e+37
    %v93 = vand.u32 %v78, 2147483648
    %v94 = vor.u32 1.1754944e-38, %v93
    %v95 = vsel %vm92, %v94, %v90
    %v96 = vmul.f32 %v81, %v95
    %97 = vst [vmem:[%s70] sm:$0xff] %v96
    %v98 = vlaneseq
    %v99 = vand.u32 %v98, 127
    %v100 = vlaneseq
    %v101 = vshrl.u32 %v100, 7
    %vm103 = vcmp.eq.s32.totalorder %v99, %v101
    %v104 = vlaneseq
    %v105 = vand.u32 %v104, 127
    %vm106 = vcmp.eq.s32.totalorder %v105, 0
    %v107 = vsel %vm106, 1.0, -1.0
    %v108 = vsel %vm103, %v107, 0.0
    %v109 = vlaneseq
    %v110 = vand.u32 %v109, 127
    %v111 = vlaneseq
    %v112 = vshrl.u32 %v111, 7
    %v113 = vadd.s32 %v112, 8
    %vm114 = vcmp.eq.s32.totalorder %v110, %v113
    %v115 = vsel %vm114, -1.0, 0.0
    %s116 = scalar_lea.vmem [#allocation2], 1
    %v117 = vld [vmem:[%s116] ss:$0 sm:$0xff]
    %v118 = vxor.u32 %v117, 2147483648
    %v119 = vlaneseq
    %v120 = vand.u32 %v119, 127
    %vm121 = vcmp.eq.s32.totalorder %v120, 1
    %v122 = vmul.f32 %v118, %v108
    %123 = vadd.xlane.f32.xlu0 %v122
    %v124 = vpop.xlane.xlu0 %123
    %v125 = vsel %vm121, %v124, %v108
    %s126 = scalar_lea.vmem [#allocation2], 2
    %v127 = vld [vmem:[%s126] ss:$0 sm:$0xff]
    %v128 = vxor.u32 %v127, 2147483648
    %v129 = vlaneseq
    %v130 = vand.u32 %v129, 127
    %vm131 = vcmp.eq.s32.totalorder %v130, 2
    %v132 = vmul.f32 %v128, %v125
    %133 = vadd.xlane.f32.xlu0 %v132
    %v134 = vpop.xlane.xlu0 %133
    %v135 = vsel %vm131, %v134, %v125
    %s136 = scalar_lea.vmem [#allocation2], 3
    %v137 = vld [vmem:[%s136] ss:$0 sm:$0xff]
    %v138 = vxor.u32 %v137, 2147483648
    %v139 = vlaneseq
    %v140 = vand.u32 %v139, 127
    %vm141 = vcmp.eq.s32.totalorder %v140, 3
    %v142 = vmul.f32 %v138, %v135
    %143 = vadd.xlane.f32.xlu0 %v142
    %v144 = vpop.xlane.xlu0 %143
    %v145 = vsel %vm141, %v144, %v135
    %s146 = scalar_lea.vmem [#allocation2], 4
    %v147 = vld [vmem:[%s146] ss:$0 sm:$0xff]
    %v148 = vxor.u32 %v147, 2147483648
    %v149 = vlaneseq
    %v150 = vand.u32 %v149, 127
    %vm151 = vcmp.eq.s32.totalorder %v150, 4
    %v152 = vmul.f32 %v148, %v145
    %153 = vadd.xlane.f32.xlu0 %v152
    %v154 = vpop.xlane.xlu0 %153
    %v155 = vsel %vm151, %v154, %v145
    %s156 = scalar_lea.vmem [#allocation2], 5
    %v157 = vld [vmem:[%s156] ss:$0 sm:$0xff]
    %v158 = vxor.u32 %v157, 2147483648
    %v159 = vlaneseq
    %v160 = vand.u32 %v159, 127
    %vm161 = vcmp.eq.s32.totalorder %v160, 5
    %v162 = vmul.f32 %v158, %v155
    %163 = vadd.xlane.f32.xlu0 %v162
    %v164 = vpop.xlane.xlu0 %163
    %v165 = vsel %vm161, %v164, %v155
    %s166 = scalar_lea.vmem [#allocation2], 6
    %v167 = vld [vmem:[%s166] ss:$0 sm:$0xff]
    %v168 = vxor.u32 %v167, 2147483648
    %v169 = vlaneseq
    %v170 = vand.u32 %v169, 127
    %vm171 = vcmp.eq.s32.totalorder %v170, 6
    %v172 = vmul.f32 %v168, %v165
    %173 = vadd.xlane.f32.xlu0 %v172
    %v174 = vpop.xlane.xlu0 %173
    %v175 = vsel %vm171, %v174, %v165
    %s176 = scalar_lea.vmem [#allocation2], 7
    %v177 = vld [vmem:[%s176] ss:$0 sm:$0xff]
    %v178 = vxor.u32 %v177, 2147483648
    %v179 = vlaneseq
    %v180 = vand.u32 %v179, 127
    %vm181 = vcmp.eq.s32.totalorder %v180, 7
    %v182 = vmul.f32 %v178, %v175
    %183 = vadd.xlane.f32.xlu0 %v182
    %v184 = vpop.xlane.xlu0 %183
    %v185 = vsel %vm181, %v184, %v175
    %s186 = scalar_lea.vmem [#allocation2], 8
    %v187 = vld [vmem:[%s186] ss:$0 sm:$0xff]
    %v188 = vxor.u32 %v187, 2147483648
    %v189 = vlaneseq
    %v190 = vand.u32 %v189, 127
    %vm191 = vcmp.eq.s32.totalorder %v190, 8
    %v192 = vmul.f32 %v188, %v185
    %193 = vadd.xlane.f32.xlu0 %v192
    %v194 = vpop.xlane.xlu0 %193
    %v195 = vsel %vm191, %v194, %v185
    %v196 = vmul.f32 %v188, %v115
    %197 = vadd.xlane.f32.xlu0 %v196
    %v198 = vpop.xlane.xlu0 %197
    %v199 = vsel %vm191, %v198, %v115
    %s200 = scalar_lea.vmem [#allocation2], 9
    %v201 = vld [vmem:[%s200] ss:$0 sm:$0xff]
    %v202 = vxor.u32 %v201, 2147483648
    %v203 = vlaneseq
    %v204 = vand.u32 %v203, 127
    %vm205 = vcmp.eq.s32.totalorder %v204, 9
    %v206 = vmul.f32 %v202, %v195
    %207 = vadd.xlane.f32.xlu0 %v206
    %v208 = vpop.xlane.xlu0 %207
    %v209 = vsel %vm205, %v208, %v195
    %v210 = vmul.f32 %v202, %v199
    %211 = vadd.xlane.f32.xlu0 %v210
    %v212 = vpop.xlane.xlu0 %211
    %v213 = vsel %vm205, %v212, %v199
    %s214 = scalar_lea.vmem [#allocation2], 10
    %v215 = vld [vmem:[%s214] ss:$0 sm:$0xff]
    %v216 = vxor.u32 %v215, 2147483648
    %v217 = vlaneseq
    %v218 = vand.u32 %v217, 127
    %vm219 = vcmp.eq.s32.totalorder %v218, 10
    %v220 = vmul.f32 %v216, %v209
    %221 = vadd.xlane.f32.xlu0 %v220
    %v222 = vpop.xlane.xlu0 %221
    %v223 = vsel %vm219, %v222, %v209
    %v224 = vmul.f32 %v216, %v213
    %225 = vadd.xlane.f32.xlu0 %v224
    %v226 = vpop.xlane.xlu0 %225
    %v227 = vsel %vm219, %v226, %v213
    %s228 = scalar_lea.vmem [#allocation2], 11
    %v229 = vld [vmem:[%s228] ss:$0 sm:$0xff]
    %v230 = vxor.u32 %v229, 2147483648
    %v231 = vlaneseq
    %v232 = vand.u32 %v231, 127
    %vm233 = vcmp.eq.s32.totalorder %v232, 11
    %v234 = vmul.f32 %v230, %v223
    %235 = vadd.xlane.f32.xlu0 %v234
    %v236 = vpop.xlane.xlu0 %235
    %v237 = vsel %vm233, %v236, %v223
    %v238 = vmul.f32 %v230, %v227
    %239 = vadd.xlane.f32.xlu0 %v238
    %v240 = vpop.xlane.xlu0 %239
    %v241 = vsel %vm233, %v240, %v227
    %s242 = scalar_lea.vmem [#allocation2], 12
    %v243 = vld [vmem:[%s242] ss:$0 sm:$0xff]
    %v244 = vxor.u32 %v243, 2147483648
    %v245 = vlaneseq
    %v246 = vand.u32 %v245, 127
    %vm247 = vcmp.eq.s32.totalorder %v246, 12
    %v248 = vmul.f32 %v244, %v237
    %249 = vadd.xlane.f32.xlu0 %v248
    %v250 = vpop.xlane.xlu0 %249
    %v251 = vsel %vm247, %v250, %v237
    %v252 = vmul.f32 %v244, %v241
    %253 = vadd.xlane.f32.xlu0 %v252
    %v254 = vpop.xlane.xlu0 %253
    %v255 = vsel %vm247, %v254, %v241
    %s256 = scalar_lea.vmem [#allocation2], 13
    %v257 = vld [vmem:[%s256] ss:$0 sm:$0xff]
    %v258 = vxor.u32 %v257, 2147483648
    %v259 = vlaneseq
    %v260 = vand.u32 %v259, 127
    %vm261 = vcmp.eq.s32.totalorder %v260, 13
    %v262 = vmul.f32 %v258, %v251
    %263 = vadd.xlane.f32.xlu0 %v262
    %v264 = vpop.xlane.xlu0 %263
    %v265 = vsel %vm261, %v264, %v251
    %v266 = vmul.f32 %v258, %v255
    %267 = vadd.xlane.f32.xlu0 %v266
    %v268 = vpop.xlane.xlu0 %267
    %v269 = vsel %vm261, %v268, %v255
    %s270 = scalar_lea.vmem [#allocation2], 14
    %v271 = vld [vmem:[%s270] ss:$0 sm:$0xff]
    %v272 = vxor.u32 %v271, 2147483648
    %v273 = vlaneseq
    %v274 = vand.u32 %v273, 127
    %vm275 = vcmp.eq.s32.totalorder %v274, 14
    %v276 = vmul.f32 %v272, %v265
    %277 = vadd.xlane.f32.xlu0 %v276
    %v278 = vpop.xlane.xlu0 %277
    %v279 = vsel %vm275, %v278, %v265
    %v280 = vmul.f32 %v272, %v269
    %281 = vadd.xlane.f32.xlu0 %v280
    %v282 = vpop.xlane.xlu0 %281
    %v283 = vsel %vm275, %v282, %v269
    %s284 = scalar_lea.vmem [#allocation2], 15
    %v285 = vld [vmem:[%s284] ss:$0 sm:$0xff]
    %v286 = vxor.u32 %v285, 2147483648
    %v287 = vlaneseq
    %v288 = vand.u32 %v287, 127
    %vm289 = vcmp.eq.s32.totalorder %v288, 15
    %v290 = vmul.f32 %v286, %v279
    %291 = vadd.xlane.f32.xlu0 %v290
    %v292 = vpop.xlane.xlu0 %291
    %v293 = vsel %vm289, %v292, %v279
    %v294 = vmul.f32 %v286, %v283
    %295 = vadd.xlane.f32.xlu0 %v294
    %v296 = vpop.xlane.xlu0 %295
    %v297 = vsel %vm289, %v296, %v283
    %v298 = vrcp.pop %v49
    %v299 = vmul.f32 %v49, %v298
    %v300 = vsub.f32 1.0, %v299
    %v301 = vmul.f32 %v298, %v300
    %v302 = vadd.f32 %v298, %v301
    %vm303 = vweird.f32 %v49
    %vm304 = vweird.f32 %v298
    %vm305 = vmor %vm303, %vm304
    %v306 = vsel %vm305, %v298, %v302
    %v307 = vand.u32 2147483647, %v49
    %vm308 = vcmp.eq.f32.partialorder %v307, 8.507059e+37
    %v309 = vand.u32 %v49, 2147483648
    %v310 = vor.u32 1.1754944e-38, %v309
    %v311 = vsel %vm308, %v310, %v306
    %v312 = vmul.f32 %v293, %v311
    %vm313 = vweird.f32 %v49
    %v314 = vsel %vm313, %v293, %v312
    %315 = vst [vmem:[#allocation1] sm:$0xff] %v314
    %v316 = vrcp.pop %v78
    %v317 = vmul.f32 %v78, %v316
    %v318 = vsub.f32 1.0, %v317
    %v319 = vmul.f32 %v316, %v318
    %v320 = vadd.f32 %v316, %v319
    %vm321 = vweird.f32 %v78
    %vm322 = vweird.f32 %v316
    %vm323 = vmor %vm321, %vm322
    %v324 = vsel %vm323, %v316, %v320
    %v325 = vand.u32 2147483647, %v78
    %vm326 = vcmp.eq.f32.partialorder %v325, 8.507059e+37
    %v327 = vand.u32 %v78, 2147483648
    %v328 = vor.u32 1.1754944e-38, %v327
    %v329 = vsel %vm326, %v328, %v324
    %v330 = vmul.f32 %v297, %v329
    %vm331 = vweird.f32 %v78
    %v332 = vsel %vm331, %v297, %v330
    %s333 = scalar_lea.vmem [#allocation1], 8
    %334 = vst [vmem:[%s333] sm:$0xff] %v332
    // Predicated region
    $region36: #{custom-call.13} parent=1 // pred_check
      _
    $region37: #{custom-call.13} parent=1 // pred_check_branch
      %336 = sbr.rel (0) target = $region39
    $region38: #{custom-call.13} parent=1 // pred_region
      // Predicated region
      $region40: #{custom-call.13} parent=38 // pred_check
        _
      $region41: #{custom-call.13} parent=38 // pred_check_branch
        %338 = sbr.rel (0) target = $region43
      $region42: #{custom-call.13} parent=38 // pred_region
        // Predicated region
        $region55: #{custom-call.13} parent=42 // pred_check
          _
        $region56: #{custom-call.13} parent=42 // pred_check_branch
          %356 = sbr.rel (0) target = $region58
        $region57: #{custom-call.13} parent=42 // pred_region
          loop: start=0, step=1, limit=1
          $region59: #{custom-call.13} parent=57 // loop_pre_header
            _
          $region60: #{custom-call.13} parent=57 // loop_header
            %s358 = sphi 0, %s362
            %p359 = scmp.ge.s32.totalorder %s358, 1
            %s363 = sphi [#allocation1], [#allocation1]
            %s364 = sphi %s1, %s1
          $region61: #{custom-call.13} parent=57 // loop_header_branch
            %361 = sbr.rel (%p359) target = $region65
          $region62: #{custom-call.13} parent=57 // loop_body
            %v365 = vld [vmem:[%s363] sm:$0xff]
            %366 = vst [vmem:[%s364] sm:$0xff] %v365
            %v367 = vld [vmem:[%s363 + $0x8] sm:$0xff]
            %368 = vst [vmem:[%s364 + $0x8] sm:$0xff] %v367
          $region63: #{custom-call.13} parent=57 // loop_footer
            %s362 = sadd.s32 1, %s358
          $region64: #{custom-call.13} parent=57 // loop_footer_branch
            %357 = sbr.rel target = $region60
          $region65: #{custom-call.13} parent=57 // loop_exit
            _
        $region58: #{custom-call.13} parent=42 // pred_fallthru
          _
        // Predicated region
        $region66: #{custom-call.13} parent=42 // pred_check
          _
        $region67: #{custom-call.13} parent=42 // pred_check_branch
          %370 = sbr.rel target = $region69
        $region68: #{custom-call.13} parent=42 // pred_region
          _
        $region69: #{custom-call.13} parent=42 // pred_fallthru
          _
      $region43: #{custom-call.13} parent=38 // pred_fallthru
        _
      // Predicated region
      $region44: #{custom-call.13} parent=38 // pred_check
        _
      $region45: #{custom-call.13} parent=38 // pred_check_branch
        %340 = sbr.rel target = $region47
      $region46: #{custom-call.13} parent=38 // pred_region
        %s342 = ssub.s32 256, 1
        loop: start=0, step=1, limit=1
        $region48: #{custom-call.13} parent=46 // loop_pre_header
          _
        $region49: #{custom-call.13} parent=46 // loop_header
          %s344 = sphi 0, %s348
          %p345 = scmp.ge.s32.totalorder %s344, 1
          %s349 = sphi [#allocation1], [#allocation1]
          %s350 = sphi %s1, %s1
        $region50: #{custom-call.13} parent=46 // loop_header_branch
          %347 = sbr.rel (%p345) target = $region54
        $region51: #{custom-call.13} parent=46 // loop_body
          %v351 = vld [vmem:[%s349] sm:%s342]
          %352 = vst [vmem:[%s350] sm:%s342] %v351
          %v353 = vld [vmem:[%s349 + $0x8] sm:%s342]
          %354 = vst [vmem:[%s350 + $0x8] sm:%s342] %v353
        $region52: #{custom-call.13} parent=46 // loop_footer
          %s348 = sadd.s32 1, %s344
        $region53: #{custom-call.13} parent=46 // loop_footer_branch
          %343 = sbr.rel target = $region49
        $region54: #{custom-call.13} parent=46 // loop_exit
          _
      $region47: #{custom-call.13} parent=38 // pred_fallthru
        _
    $region39: #{custom-call.13} parent=1 // pred_fallthru
      _
    %371 = vnop

// kernel: custom-call.12
$region0: #{custom-call.12}
  %s0 = inlined_call_operand.vmem [shape: f32[1,16,16], index: 0, kind: input, shape index: {}]
  %s1 = inlined_call_operand.vmem [shape: f32[1,16,16], index: 1, kind: output, shape index: {}]
  $region1: #{custom-call.12} parent=0
    #allocation0 [shape = 'u8[8192]{0}', space=vmem, size = 0x2000, scoped, tag = 'operand span for operand 0']
    #allocation1 [shape = 'u8[8192]{0}', space=vmem, size = 0x2000, scoped, tag = 'operand span for operand 1']
    #allocation2 [shape = 'f32[16,16]{1,0}', space=vmem, size = 0x2000, scoped, tag = 'rescaled input a']
    // Predicated region
    $region2: #{custom-call.12} parent=1 // pred_check
      _
    $region3: #{custom-call.12} parent=1 // pred_check_branch
      %3 = sbr.rel (0) target = $region5
    $region4: #{custom-call.12} parent=1 // pred_region
      // Predicated region
      $region6: #{custom-call.12} parent=4 // pred_check
        _
      $region7: #{custom-call.12} parent=4 // pred_check_branch
        %5 = sbr.rel (0) target = $region9
      $region8: #{custom-call.12} parent=4 // pred_region
        // Predicated region
        $region21: #{custom-call.12} parent=8 // pred_check
          _
        $region22: #{custom-call.12} parent=8 // pred_check_branch
          %23 = sbr.rel (0) target = $region24
        $region23: #{custom-call.12} parent=8 // pred_region
          loop: start=0, step=1, limit=1
          $region25: #{custom-call.12} parent=23 // loop_pre_header
            _
          $region26: #{custom-call.12} parent=23 // loop_header
            %s25 = sphi 0, %s29
            %p26 = scmp.ge.s32.totalorder %s25, 1
            %s30 = sphi %s0, %s0
            %s31 = sphi [#allocation0], [#allocation0]
          $region27: #{custom-call.12} parent=23 // loop_header_branch
            %28 = sbr.rel (%p26) target = $region31
          $region28: #{custom-call.12} parent=23 // loop_body
            %v32 = vld [vmem:[%s30] sm:$0xff]
            %33 = vst [vmem:[%s31] sm:$0xff] %v32
            %v34 = vld [vmem:[%s30 + $0x8] sm:$0xff]
            %35 = vst [vmem:[%s31 + $0x8] sm:$0xff] %v34
          $region29: #{custom-call.12} parent=23 // loop_footer
            %s29 = sadd.s32 1, %s25
          $region30: #{custom-call.12} parent=23 // loop_footer_branch
            %24 = sbr.rel target = $region26
          $region31: #{custom-call.12} parent=23 // loop_exit
            _
        $region24: #{custom-call.12} parent=8 // pred_fallthru
          _
        // Predicated region
        $region32: #{custom-call.12} parent=8 // pred_check
          _
        $region33: #{custom-call.12} parent=8 // pred_check_branch
          %37 = sbr.rel target = $region35
        $region34: #{custom-call.12} parent=8 // pred_region
          _
        $region35: #{custom-call.12} parent=8 // pred_fallthru
          _
      $region9: #{custom-call.12} parent=4 // pred_fallthru
        _
      // Predicated region
      $region10: #{custom-call.12} parent=4 // pred_check
        _
      $region11: #{custom-call.12} parent=4 // pred_check_branch
        %7 = sbr.rel target = $region13
      $region12: #{custom-call.12} parent=4 // pred_region
        %s9 = ssub.s32 256, 1
        loop: start=0, step=1, limit=1
        $region14: #{custom-call.12} parent=12 // loop_pre_header
          _
        $region15: #{custom-call.12} parent=12 // loop_header
          %s11 = sphi 0, %s15
          %p12 = scmp.ge.s32.totalorder %s11, 1
          %s16 = sphi %s0, %s0
          %s17 = sphi [#allocation0], [#allocation0]
        $region16: #{custom-call.12} parent=12 // loop_header_branch
          %14 = sbr.rel (%p12) target = $region20
        $region17: #{custom-call.12} parent=12 // loop_body
          %v18 = vld [vmem:[%s16] sm:%s9]
          %19 = vst [vmem:[%s17] sm:%s9] %v18
          %v20 = vld [vmem:[%s16 + $0x8] sm:%s9]
          %21 = vst [vmem:[%s17 + $0x8] sm:%s9] %v20
        $region18: #{custom-call.12} parent=12 // loop_footer
          %s15 = sadd.s32 1, %s11
        $region19: #{custom-call.12} parent=12 // loop_footer_branch
          %10 = sbr.rel target = $region15
        $region20: #{custom-call.12} parent=12 // loop_exit
          _
      $region13: #{custom-call.12} parent=4 // pred_fallthru
        _
    $region5: #{custom-call.12} parent=1 // pred_fallthru
      _
    %38 = vnop
    %v39 = vlaneseq
    %v40 = vand.u32 %v39, 127
    %vm41 = vcmp.lt.s32.totalorder %v40, 16
    %v42 = vlaneseq
    %v43 = vshrl.u32 %v42, 7
    %vm45 = vcmp.eq.s32.totalorder %v43, %v40
    %v46 = vld [vmem:[#allocation0] sm:$0xff]
    %v47 = vsel %vm45, %v46, 0.0
    %48 = vadd.xlane.f32.xlu0 %v47
    %v49 = vpop.xlane.xlu0 %48
    %vm50 = vcmp.le.s32.totalorder %v43, %v40
    %vm51 = vmand %vm50, %vm41
    %v52 = vsel %vm51, %v46, 0.0
    %v53 = vrcp.pop %v49
    %v54 = vmul.f32 %v49, %v53
    %v55 = vsub.f32 1.0, %v54
    %v56 = vmul.f32 %v53, %v55
    %v57 = vadd.f32 %v53, %v56
    %vm58 = vweird.f32 %v49
    %vm59 = vweird.f32 %v53
    %vm60 = vmor %vm58, %vm59
    %v61 = vsel %vm60, %v53, %v57
    %v62 = vand.u32 2147483647, %v49
    %vm63 = vcmp.eq.f32.partialorder %v62, 8.507059e+37
    %v64 = vand.u32 %v49, 2147483648
    %v65 = vor.u32 1.1754944e-38, %v64
    %v66 = vsel %vm63, %v65, %v61
    %v67 = vmul.f32 %v52, %v66
    %68 = vst [vmem:[#allocation2] sm:$0xff] %v67
    %s69 = scalar_lea.vmem [#allocation0], 8
    %s70 = scalar_lea.vmem [#allocation2], 8
    %v71 = vlaneseq
    %v72 = vshrl.u32 %v71, 7
    %v73 = vadd.s32 %v72, 8
    %vm74 = vcmp.eq.s32.totalorder %v73, %v40
    %v75 = vld [vmem:[%s69] sm:$0xff]
    %v76 = vsel %vm74, %v75, 0.0
    %77 = vadd.xlane.f32.xlu0 %v76
    %v78 = vpop.xlane.xlu0 %77
    %vm79 = vcmp.le.s32.totalorder %v73, %v40
    %vm80 = vmand %vm79, %vm41
    %v81 = vsel %vm80, %v75, 0.0
    %v82 = vrcp.pop %v78
    %v83 = vmul.f32 %v78, %v82
    %v84 = vsub.f32 1.0, %v83
    %v85 = vmul.f32 %v82, %v84
    %v86 = vadd.f32 %v82, %v85
    %vm87 = vweird.f32 %v78
    %vm88 = vweird.f32 %v82
    %vm89 = vmor %vm87, %vm88
    %v90 = vsel %vm89, %v82, %v86
    %v91 = vand.u32 2147483647, %v78
    %vm92 = vcmp.eq.f32.partialorder %v91, 8.507059e+37
    %v93 = vand.u32 %v78, 2147483648
    %v94 = vor.u32 1.1754944e-38, %v93
    %v95 = vsel %vm92, %v94, %v90
    %v96 = vmul.f32 %v81, %v95
    %97 = vst [vmem:[%s70] sm:$0xff] %v96
    %v98 = vlaneseq
    %v99 = vand.u32 %v98, 127
    %v100 = vlaneseq
    %v101 = vshrl.u32 %v100, 7
    %vm103 = vcmp.eq.s32.totalorder %v99, %v101
    %v104 = vsel %vm103, -1.0, 0.0
    %v105 = vlaneseq
    %v106 = vand.u32 %v105, 127
    %v107 = vlaneseq
    %v108 = vshrl.u32 %v107, 7
    %v109 = vadd.s32 %v108, 8
    %vm110 = vcmp.eq.s32.totalorder %v106, %v109
    %v111 = vlaneseq
    %v112 = vand.u32 %v111, 127
    %vm113 = vcmp.eq.s32.totalorder %v112, 15
    %v114 = vsel %vm113, 1.0, -1.0
    %v115 = vsel %vm110, %v114, 0.0
    %s116 = scalar_lea.vmem [#allocation2], 14
    %v117 = vld [vmem:[%s116] ss:$0 sm:$0xff]
    %v118 = vxor.u32 %v117, 2147483648
    %v119 = vlaneseq
    %v120 = vand.u32 %v119, 127
    %vm121 = vcmp.eq.s32.totalorder %v120, 14
    %v122 = vmul.f32 %v118, %v115
    %123 = vadd.xlane.f32.xlu0 %v122
    %v124 = vpop.xlane.xlu0 %123
    %v125 = vsel %vm121, %v124, %v115
    %s126 = scalar_lea.vmem [#allocation2], 13
    %v127 = vld [vmem:[%s126] ss:$0 sm:$0xff]
    %v128 = vxor.u32 %v127, 2147483648
    %v129 = vlaneseq
    %v130 = vand.u32 %v129, 127
    %vm131 = vcmp.eq.s32.totalorder %v130, 13
    %v132 = vmul.f32 %v128, %v125
    %133 = vadd.xlane.f32.xlu0 %v132
    %v134 = vpop.xlane.xlu0 %133
    %v135 = vsel %vm131, %v134, %v125
    %s136 = scalar_lea.vmem [#allocation2], 12
    %v137 = vld [vmem:[%s136] ss:$0 sm:$0xff]
    %v138 = vxor.u32 %v137, 2147483648
    %v139 = vlaneseq
    %v140 = vand.u32 %v139, 127
    %vm141 = vcmp.eq.s32.totalorder %v140, 12
    %v142 = vmul.f32 %v138, %v135
    %143 = vadd.xlane.f32.xlu0 %v142
    %v144 = vpop.xlane.xlu0 %143
    %v145 = vsel %vm141, %v144, %v135
    %s146 = scalar_lea.vmem [#allocation2], 11
    %v147 = vld [vmem:[%s146] ss:$0 sm:$0xff]
    %v148 = vxor.u32 %v147, 2147483648
    %v149 = vlaneseq
    %v150 = vand.u32 %v149, 127
    %vm151 = vcmp.eq.s32.totalorder %v150, 11
    %v152 = vmul.f32 %v148, %v145
    %153 = vadd.xlane.f32.xlu0 %v152
    %v154 = vpop.xlane.xlu0 %153
    %v155 = vsel %vm151, %v154, %v145
    %s156 = scalar_lea.vmem [#allocation2], 10
    %v157 = vld [vmem:[%s156] ss:$0 sm:$0xff]
    %v158 = vxor.u32 %v157, 2147483648
    %v159 = vlaneseq
    %v160 = vand.u32 %v159, 127
    %vm161 = vcmp.eq.s32.totalorder %v160, 10
    %v162 = vmul.f32 %v158, %v155
    %163 = vadd.xlane.f32.xlu0 %v162
    %v164 = vpop.xlane.xlu0 %163
    %v165 = vsel %vm161, %v164, %v155
    %s166 = scalar_lea.vmem [#allocation2], 9
    %v167 = vld [vmem:[%s166] ss:$0 sm:$0xff]
    %v168 = vxor.u32 %v167, 2147483648
    %v169 = vlaneseq
    %v170 = vand.u32 %v169, 127
    %vm171 = vcmp.eq.s32.totalorder %v170, 9
    %v172 = vmul.f32 %v168, %v165
    %173 = vadd.xlane.f32.xlu0 %v172
    %v174 = vpop.xlane.xlu0 %173
    %v175 = vsel %vm171, %v174, %v165
    %s176 = scalar_lea.vmem [#allocation2], 8
    %v177 = vld [vmem:[%s176] ss:$0 sm:$0xff]
    %v178 = vxor.u32 %v177, 2147483648
    %v179 = vlaneseq
    %v180 = vand.u32 %v179, 127
    %vm181 = vcmp.eq.s32.totalorder %v180, 8
    %v182 = vmul.f32 %v178, %v175
    %183 = vadd.xlane.f32.xlu0 %v182
    %v184 = vpop.xlane.xlu0 %183
    %v185 = vsel %vm181, %v184, %v175
    %s186 = scalar_lea.vmem [#allocation2], 7
    %v187 = vld [vmem:[%s186] ss:$0 sm:$0xff]
    %v188 = vxor.u32 %v187, 2147483648
    %v189 = vlaneseq
    %v190 = vand.u32 %v189, 127
    %vm191 = vcmp.eq.s32.totalorder %v190, 7
    %v192 = vmul.f32 %v188, %v104
    %193 = vadd.xlane.f32.xlu0 %v192
    %v194 = vpop.xlane.xlu0 %193
    %v195 = vsel %vm191, %v194, %v104
    %v196 = vmul.f32 %v188, %v185
    %197 = vadd.xlane.f32.xlu0 %v196
    %v198 = vpop.xlane.xlu0 %197
    %v199 = vsel %vm191, %v198, %v185
    %s200 = scalar_lea.vmem [#allocation2], 6
    %v201 = vld [vmem:[%s200] ss:$0 sm:$0xff]
    %v202 = vxor.u32 %v201, 2147483648
    %v203 = vlaneseq
    %v204 = vand.u32 %v203, 127
    %vm205 = vcmp.eq.s32.totalorder %v204, 6
    %v206 = vmul.f32 %v202, %v195
    %207 = vadd.xlane.f32.xlu0 %v206
    %v208 = vpop.xlane.xlu0 %207
    %v209 = vsel %vm205, %v208, %v195
    %v210 = vmul.f32 %v202, %v199
    %211 = vadd.xlane.f32.xlu0 %v210
    %v212 = vpop.xlane.xlu0 %211
    %v213 = vsel %vm205, %v212, %v199
    %s214 = scalar_lea.vmem [#allocation2], 5
    %v215 = vld [vmem:[%s214] ss:$0 sm:$0xff]
    %v216 = vxor.u32 %v215, 2147483648
    %v217 = vlaneseq
    %v218 = vand.u32 %v217, 127
    %vm219 = vcmp.eq.s32.totalorder %v218, 5
    %v220 = vmul.f32 %v216, %v209
    %221 = vadd.xlane.f32.xlu0 %v220
    %v222 = vpop.xlane.xlu0 %221
    %v223 = vsel %vm219, %v222, %v209
    %v224 = vmul.f32 %v216, %v213
    %225 = vadd.xlane.f32.xlu0 %v224
    %v226 = vpop.xlane.xlu0 %225
    %v227 = vsel %vm219, %v226, %v213
    %s228 = scalar_lea.vmem [#allocation2], 4
    %v229 = vld [vmem:[%s228] ss:$0 sm:$0xff]
    %v230 = vxor.u32 %v229, 2147483648
    %v231 = vlaneseq
    %v232 = vand.u32 %v231, 127
    %vm233 = vcmp.eq.s32.totalorder %v232, 4
    %v234 = vmul.f32 %v230, %v223
    %235 = vadd.xlane.f32.xlu0 %v234
    %v236 = vpop.xlane.xlu0 %235
    %v237 = vsel %vm233, %v236, %v223
    %v238 = vmul.f32 %v230, %v227
    %239 = vadd.xlane.f32.xlu0 %v238
    %v240 = vpop.xlane.xlu0 %239
    %v241 = vsel %vm233, %v240, %v227
    %s242 = scalar_lea.vmem [#allocation2], 3
    %v243 = vld [vmem:[%s242] ss:$0 sm:$0xff]
    %v244 = vxor.u32 %v243, 2147483648
    %v245 = vlaneseq
    %v246 = vand.u32 %v245, 127
    %vm247 = vcmp.eq.s32.totalorder %v246, 3
    %v248 = vmul.f32 %v244, %v237
    %249 = vadd.xlane.f32.xlu0 %v248
    %v250 = vpop.xlane.xlu0 %249
    %v251 = vsel %vm247, %v250, %v237
    %v252 = vmul.f32 %v244, %v241
    %253 = vadd.xlane.f32.xlu0 %v252
    %v254 = vpop.xlane.xlu0 %253
    %v255 = vsel %vm247, %v254, %v241
    %s256 = scalar_lea.vmem [#allocation2], 2
    %v257 = vld [vmem:[%s256] ss:$0 sm:$0xff]
    %v258 = vxor.u32 %v257, 2147483648
    %v259 = vlaneseq
    %v260 = vand.u32 %v259, 127
    %vm261 = vcmp.eq.s32.totalorder %v260, 2
    %v262 = vmul.f32 %v258, %v251
    %263 = vadd.xlane.f32.xlu0 %v262
    %v264 = vpop.xlane.xlu0 %263
    %v265 = vsel %vm261, %v264, %v251
    %v266 = vmul.f32 %v258, %v255
    %267 = vadd.xlane.f32.xlu0 %v266
    %v268 = vpop.xlane.xlu0 %267
    %v269 = vsel %vm261, %v268, %v255
    %s270 = scalar_lea.vmem [#allocation2], 1
    %v271 = vld [vmem:[%s270] ss:$0 sm:$0xff]
    %v272 = vxor.u32 %v271, 2147483648
    %v273 = vlaneseq
    %v274 = vand.u32 %v273, 127
    %vm275 = vcmp.eq.s32.totalorder %v274, 1
    %v276 = vmul.f32 %v272, %v265
    %277 = vadd.xlane.f32.xlu0 %v276
    %v278 = vpop.xlane.xlu0 %277
    %v279 = vsel %vm275, %v278, %v265
    %v280 = vmul.f32 %v272, %v269
    %281 = vadd.xlane.f32.xlu0 %v280
    %v282 = vpop.xlane.xlu0 %281
    %v283 = vsel %vm275, %v282, %v269
    %v284 = vld [vmem:[#allocation2] ss:$0 sm:$0xff]
    %v285 = vxor.u32 %v284, 2147483648
    %v286 = vlaneseq
    %v287 = vand.u32 %v286, 127
    %vm288 = vcmp.eq.s32.totalorder %v287, 0
    %v289 = vmul.f32 %v285, %v279
    %290 = vadd.xlane.f32.xlu0 %v289
    %v291 = vpop.xlane.xlu0 %290
    %v292 = vsel %vm288, %v291, %v279
    %v293 = vmul.f32 %v285, %v283
    %294 = vadd.xlane.f32.xlu0 %v293
    %v295 = vpop.xlane.xlu0 %294
    %v296 = vsel %vm288, %v295, %v283
    %v297 = vrcp.pop %v49
    %v298 = vmul.f32 %v49, %v297
    %v299 = vsub.f32 1.0, %v298
    %v300 = vmul.f32 %v297, %v299
    %v301 = vadd.f32 %v297, %v300
    %vm302 = vweird.f32 %v49
    %vm303 = vweird.f32 %v297
    %vm304 = vmor %vm302, %vm303
    %v305 = vsel %vm304, %v297, %v301
    %v306 = vand.u32 2147483647, %v49
    %vm307 = vcmp.eq.f32.partialorder %v306, 8.507059e+37
    %v308 = vand.u32 %v49, 2147483648
    %v309 = vor.u32 1.1754944e-38, %v308
    %v310 = vsel %vm307, %v309, %v305
    %v311 = vmul.f32 %v292, %v310
    %vm312 = vweird.f32 %v49
    %v313 = vsel %vm312, %v292, %v311
    %314 = vst [vmem:[#allocation1] sm:$0xff] %v313
    %v315 = vrcp.pop %v78
    %v316 = vmul.f32 %v78, %v315
    %v317 = vsub.f32 1.0, %v316
    %v318 = vmul.f32 %v315, %v317
    %v319 = vadd.f32 %v315, %v318
    %vm320 = vweird.f32 %v78
    %vm321 = vweird.f32 %v315
    %vm322 = vmor %vm320, %vm321
    %v323 = vsel %vm322, %v315, %v319
    %v324 = vand.u32 2147483647, %v78
    %vm325 = vcmp.eq.f32.partialorder %v324, 8.507059e+37
    %v326 = vand.u32 %v78, 2147483648
    %v327 = vor.u32 1.1754944e-38, %v326
    %v328 = vsel %vm325, %v327, %v323
    %v329 = vmul.f32 %v296, %v328
    %vm330 = vweird.f32 %v78
    %v331 = vsel %vm330, %v296, %v329
    %s332 = scalar_lea.vmem [#allocation1], 8
    %333 = vst [vmem:[%s332] sm:$0xff] %v331
    // Predicated region
    $region36: #{custom-call.12} parent=1 // pred_check
      _
    $region37: #{custom-call.12} parent=1 // pred_check_branch
      %335 = sbr.rel (0) target = $region39
    $region38: #{custom-call.12} parent=1 // pred_region
      // Predicated region
      $region40: #{custom-call.12} parent=38 // pred_check
        _
      $region41: #{custom-call.12} parent=38 // pred_check_branch
        %337 = sbr.rel (0) target = $region43
      $region42: #{custom-call.12} parent=38 // pred_region
        // Predicated region
        $region55: #{custom-call.12} parent=42 // pred_check
          _
        $region56: #{custom-call.12} parent=42 // pred_check_branch
          %355 = sbr.rel (0) target = $region58
        $region57: #{custom-call.12} parent=42 // pred_region
          loop: start=0, step=1, limit=1
          $region59: #{custom-call.12} parent=57 // loop_pre_header
            _
          $region60: #{custom-call.12} parent=57 // loop_header
            %s357 = sphi 0, %s361
            %p358 = scmp.ge.s32.totalorder %s357, 1
            %s362 = sphi [#allocation1], [#allocation1]
            %s363 = sphi %s1, %s1
          $region61: #{custom-call.12} parent=57 // loop_header_branch
            %360 = sbr.rel (%p358) target = $region65
          $region62: #{custom-call.12} parent=57 // loop_body
            %v364 = vld [vmem:[%s362] sm:$0xff]
            %365 = vst [vmem:[%s363] sm:$0xff] %v364
            %v366 = vld [vmem:[%s362 + $0x8] sm:$0xff]
            %367 = vst [vmem:[%s363 + $0x8] sm:$0xff] %v366
          $region63: #{custom-call.12} parent=57 // loop_footer
            %s361 = sadd.s32 1, %s357
          $region64: #{custom-call.12} parent=57 // loop_footer_branch
            %356 = sbr.rel target = $region60
          $region65: #{custom-call.12} parent=57 // loop_exit
            _
        $region58: #{custom-call.12} parent=42 // pred_fallthru
          _
        // Predicated region
        $region66: #{custom-call.12} parent=42 // pred_check
          _
        $region67: #{custom-call.12} parent=42 // pred_check_branch
          %369 = sbr.rel target = $region69
        $region68: #{custom-call.12} parent=42 // pred_region
          _
        $region69: #{custom-call.12} parent=42 // pred_fallthru
          _
      $region43: #{custom-call.12} parent=38 // pred_fallthru
        _
      // Predicated region
      $region44: #{custom-call.12} parent=38 // pred_check
        _
      $region45: #{custom-call.12} parent=38 // pred_check_branch
        %339 = sbr.rel target = $region47
      $region46: #{custom-call.12} parent=38 // pred_region
        %s341 = ssub.s32 256, 1
        loop: start=0, step=1, limit=1
        $region48: #{custom-call.12} parent=46 // loop_pre_header
          _
        $region49: #{custom-call.12} parent=46 // loop_header
          %s343 = sphi 0, %s347
          %p344 = scmp.ge.s32.totalorder %s343, 1
          %s348 = sphi [#allocation1], [#allocation1]
          %s349 = sphi %s1, %s1
        $region50: #{custom-call.12} parent=46 // loop_header_branch
          %346 = sbr.rel (%p344) target = $region54
        $region51: #{custom-call.12} parent=46 // loop_body
          %v350 = vld [vmem:[%s348] sm:%s341]
          %351 = vst [vmem:[%s349] sm:%s341] %v350
          %v352 = vld [vmem:[%s348 + $0x8] sm:%s341]
          %353 = vst [vmem:[%s349 + $0x8] sm:%s341] %v352
        $region52: #{custom-call.12} parent=46 // loop_footer
          %s347 = sadd.s32 1, %s343
        $region53: #{custom-call.12} parent=46 // loop_footer_branch
          %342 = sbr.rel target = $region49
        $region54: #{custom-call.12} parent=46 // loop_exit
          _
      $region47: #{custom-call.12} parent=38 // pred_fallthru
        _
    $region39: #{custom-call.12} parent=1 // pred_fallthru
      _
    %370 = vnop

// kernel: ddec_forward.2
$region0: #{ddec_forward.2}
  #allocation0 [shape = 'u32[]', space=smem, size = 0x4, offset = 0x4, fixed_abs, tag = 'smem constant byte address 0x4 - core index']
  #allocation1 [shape = 'u32[72,128]{1,0:T(1,128)}', space=vmem, size = 0x9000, scoped, tag = 'internal scratch']
  %s0 = inlined_call_operand.vmem [shape: f32[16,32], index: 0, kind: input, shape index: {}]
  %s1 = inlined_call_operand.vmem [shape: f32[1,32], index: 1, kind: input, shape index: {}]
  %s2 = inlined_call_operand.vmem [shape: f32[16,1], index: 2, kind: input, shape index: {}]
  %s3 = inlined_call_operand.vmem [shape: f32[1,32], index: 3, kind: input, shape index: {}]
  %s4 = inlined_call_operand.vmem [shape: f32[1,16], index: 4, kind: input, shape index: {}]
  %s5 = inlined_call_operand.vmem [shape: f32[16,16], index: 5, kind: output, shape index: {}]
  %s6 = sld [smem:[#allocation0]]
  $region30: #{ddec_forward.2} parent=0
    _
  %s8 = ssub.s32 1, %s6
  %s9 = scalar_select 0, %s8, %s6
  // Predicated region
  $region2: #{ddec_forward.2} parent=0 // pred_check
    _
  $region3: #{ddec_forward.2} parent=0 // pred_check_branch
    %11 = sbr.rel (0) target = $region5
  $region4: #{ddec_forward.2} parent=0 // pred_region
    _
  $region5: #{ddec_forward.2} parent=0 // pred_fallthru
    _
  // Predicated region
  $region6: #{ddec_forward.2} parent=0 // pred_check
    _
  $region7: #{ddec_forward.2} parent=0 // pred_check_branch
    %13 = sbr.rel (0) target = $region9
  $region8: #{ddec_forward.2} parent=0 // pred_region
    _
  $region9: #{ddec_forward.2} parent=0 // pred_fallthru
    _
  // Predicated region
  $region10: #{ddec_forward.2} parent=0 // pred_check
    _
  $region11: #{ddec_forward.2} parent=0 // pred_check_branch
    %15 = sbr.rel (0) target = $region13
  $region12: #{ddec_forward.2} parent=0 // pred_region
    _
  $region13: #{ddec_forward.2} parent=0 // pred_fallthru
    _
  // Predicated region
  $region14: #{ddec_forward.2} parent=0 // pred_check
    _
  $region15: #{ddec_forward.2} parent=0 // pred_check_branch
    %17 = sbr.rel (0) target = $region17
  $region16: #{ddec_forward.2} parent=0 // pred_region
    _
  $region17: #{ddec_forward.2} parent=0 // pred_fallthru
    _
  // Predicated region
  $region18: #{ddec_forward.2} parent=0 // pred_check
    _
  $region19: #{ddec_forward.2} parent=0 // pred_check_branch
    %19 = sbr.rel (0) target = $region21
  $region20: #{ddec_forward.2} parent=0 // pred_region
    _
  $region21: #{ddec_forward.2} parent=0 // pred_fallthru
    _
  %v20 = vld [vmem:[%s0] sm:$0xff]
  %v21 = vld [vmem:[%s0 + $0x8] sm:$0xff]
  %v22 = vld [vmem:[%s1] sm:$0x1]
  %v23 = vmul.f32 %v22, %v22
  %v24 = vadd.f32 %v23, 1e-05
  %v25 = vld [vmem:[%s3] sm:$0x1]
  %v26 = vmul.f32 %v25, %v25
  %v27 = vadd.f32 %v26, 1e-05
  %v28 = vmul.f32 %v24, %v27
  %v29 = vrcp.pop %v28
  %v30 = vmul.f32 %v28, %v29
  %v31 = vsub.f32 1.0, %v30
  %v32 = vmul.f32 %v29, %v31
  %v33 = vadd.f32 %v29, %v32
  %vm34 = vweird.f32 %v28
  %vm35 = vweird.f32 %v29
  %vm36 = vmor %vm34, %vm35
  %v37 = vsel %vm36, %v29, %v33
  %v38 = vand.u32 2147483647, %v28
  %vm39 = vcmp.eq.f32.partialorder %v38, 8.507059e+37
  %v40 = vand.u32 %v28, 2147483648
  %v41 = vor.u32 1.1754944e-38, %v40
  %v42 = vsel %vm39, %v41, %v37
  %v43 = vmul.f32 1.0, %v42
  %v45 = vperm.slane %v43, 0
  %v47 = vmul.f32 %v20, %v45
  %v48 = vmul.f32 %v21, %v45
  %vm49 = vcmask 261120
  %v51 = vsel %vm49, %v47, 0
  %v54 = vsel %vm49, %v48, 0
  %v57 = vsel %vm49, %v20, 0
  %v60 = vsel %vm49, %v21, 0
  %62 = vmatpush.xpose.msra.mxu0 0.0
  %63 = vmatpush.xpose.msra.mxu0 0.0
  %64 = vmatpush.xpose.msra.mxu0 0.0
  %65 = vmatpush.xpose.msra.mxu0 0.0
  %66 = vmatpush.xpose.msra.mxu0 0.0
  %67 = vmatpush.xpose.msra.mxu0 0.0
  %68 = vmatpush.xpose.msra.mxu0 0.0
  %69 = vmatpush.xpose.msra.mxu0 0.0
  %70 = vmatpush.xpose.msra.mxu0 0.0
  %71 = vmatpush.xpose.msra.mxu0 0.0
  %72 = vmatpush.xpose.msra.mxu0 0.0
  %73 = vmatpush.xpose.msra.mxu0 0.0
  %74 = vmatpush.xpose.msra.mxu0 0.0
  %75 = vmatpush.xpose.msra.mxu0 0.0
  %76 = vmatpush.xpose.msra.mxu0 %v60
  %77 = vmatpush.xpose.msra.mxu0 %v57
  %78 = vmatmul.f32.gmra.mxu0 %v51
  %v79 = vpop.f32.mrf.mxu0
  %v80 = vadd.f32 0.0, %v79
  %81 = vmatmul.f32.gmra.mxu0 %v54
  %v82 = vpop.f32.mrf.mxu0
  %v83 = vadd.f32 0.0, %v82
  %84 = vdwg.mxu0
  %v85 = vlaneseq
  %v86 = vshrl.u32 %v85, 7
  %v87 = vadd.s32 %v86, 8
  %v88 = vlaneseq
  %v89 = vand.u32 %v88, 127
  %vm90 = vcmp.eq.s32.totalorder %v86, %v89
  %vm91 = vcmp.eq.s32.totalorder %v87, %v89
  %v92 = vsel %vm90, 1e-06, 0.0
  %v93 = vsel %vm91, 1e-06, 0.0
  %v94 = vld [vmem:[%s2] sm:$0xff]
  %v95 = vld [vmem:[%s2 + $0x8] sm:$0xff]
  %v96 = vmul.f32 %v94, %v94
  %v97 = vmul.f32 %v95, %v95
  %99 = vset.pattern.permute.xlu0 0
  %100 = vperm.xlu0 %99, %v96
  %v101 = vpop.permute.xlu0 %100
  %104 = vset.pattern.permute.xlu0 0
  %105 = vperm.xlu0 %104, %v97
  %v106 = vpop.permute.xlu0 %105
  %v108 = vmul.f32 %v101, %v80
  %v109 = vmul.f32 %v106, %v83
  %v110 = vld [vmem:[%s4] sm:$0x1]
  %v111 = vmul.f32 %v110, %v110
  %v113 = vperm.slane %v111, 0
  %v115 = vmul.f32 %v108, %v113
  %v116 = vmul.f32 %v109, %v113
  %v117 = vadd.f32 %v115, %v92
  %v118 = vadd.f32 %v116, %v93
  %vm119 = vcmask 130048
  %120 = vst.msk [vmem:[%s5] sm:$0xff] %vm119, %v117
  %121 = vst.msk [vmem:[%s5 + $0x8] sm:$0xff] %vm119, %v118
  // Predicated region
  $region22: #{ddec_forward.2} parent=0 // pred_check
    _
  $region23: #{ddec_forward.2} parent=0 // pred_check_branch
    %123 = sbr.rel (0) target = $region25
  $region24: #{ddec_forward.2} parent=0 // pred_region
    _
  $region25: #{ddec_forward.2} parent=0 // pred_fallthru
    _
  // Predicated region
  $region26: #{ddec_forward.2} parent=0 // pred_check
    _
  $region27: #{ddec_forward.2} parent=0 // pred_check_branch
    %125 = sbr.rel (0) target = $region29
  $region28: #{ddec_forward.2} parent=0 // pred_region
    _
  $region29: #{ddec_forward.2} parent=0 // pred_fallthru
    _

// kernel: ddec_forward.3
$region0: #{ddec_forward.3}
  #allocation0 [shape = 'u32[]', space=smem, size = 0x4, offset = 0x4, fixed_abs, tag = 'smem constant byte address 0x4 - core index']
  #allocation1 [shape = 'u32[72,128]{1,0:T(1,128)}', space=vmem, size = 0x9000, scoped, tag = 'internal scratch']
  %s0 = inlined_call_operand.vmem [shape: f32[16,16], index: 0, kind: input, shape index: {}]
  %s1 = inlined_call_operand.vmem [shape: f32[16,16], index: 1, kind: input, shape index: {}]
  %s2 = inlined_call_operand.vmem [shape: f32[1,16], index: 2, kind: input, shape index: {}]
  %s3 = inlined_call_operand.vmem [shape: f32[1,16], index: 3, kind: input, shape index: {}]
  %s4 = inlined_call_operand.hbm [shape: f32[1,16], index: 4, kind: output, shape index: {0}]
  %s5 = inlined_call_operand.hbm [shape: f32[1,16], index: 5, kind: output, shape index: {1}]
  %s6 = inlined_call_operand.hbm [shape: f32[1], index: 6, kind: output, shape index: {2}]
  %7 = xla_tuple %s4, %s5, %s6
  %s8 = sld [smem:[#allocation0]]
  $region42: #{ddec_forward.3} parent=0
    _
  %s10 = ssub.s32 1, %s8
  %s11 = scalar_select 0, %s10, %s8
  $region1: #{ddec_forward.3} parent=0
    #allocation2 [shape = 'u8[512]{0}', space=vmem, size = 0x400, scoped, tag = 'output window, operand 0, single buffered']
    #allocation3 [shape = 's32[1]{0}', space=sflag, size = 0x4, scoped, tag = 'scoped memory for ddec_forward.3']
    #allocation4 [shape = 's32[1]{0}', space=sflag, size = 0x4, scoped, tag = 'scoped memory for ddec_forward.3']
    #allocation5 [shape = 'u8[512]{0}', space=vmem, size = 0x400, scoped, tag = 'output window, operand 1, single buffered']
    #allocation6 [shape = 's32[1]{0}', space=sflag, size = 0x4, scoped, tag = 'scoped memory for ddec_forward.3']
    #allocation7 [shape = 'u8[512]{0}', space=smem, size = 0x200, scoped, tag = 'output window, operand 2, single buffered']
    %12 = vsyncpa [#allocation3], 0
    %13 = vsyncpa [#allocation6], 0
    %14 = vsyncpa [#allocation4], 0
    // Predicated region
    $region2: #{ddec_forward.3} parent=1 // pred_check
      _
    $region3: #{ddec_forward.3} parent=1 // pred_check_branch
      %16 = sbr.rel (0) target = $region5
    $region4: #{ddec_forward.3} parent=1 // pred_region
      _
    $region5: #{ddec_forward.3} parent=1 // pred_fallthru
      _
    // Predicated region
    $region6: #{ddec_forward.3} parent=1 // pred_check
      _
    $region7: #{ddec_forward.3} parent=1 // pred_check_branch
      %18 = sbr.rel (0) target = $region9
    $region8: #{ddec_forward.3} parent=1 // pred_region
      _
    $region9: #{ddec_forward.3} parent=1 // pred_fallthru
      _
    // Predicated region
    $region10: #{ddec_forward.3} parent=1 // pred_check
      _
    $region11: #{ddec_forward.3} parent=1 // pred_check_branch
      %20 = sbr.rel (0) target = $region13
    $region12: #{ddec_forward.3} parent=1 // pred_region
      _
    $region13: #{ddec_forward.3} parent=1 // pred_fallthru
      _
    // Predicated region
    $region14: #{ddec_forward.3} parent=1 // pred_check
      _
    $region15: #{ddec_forward.3} parent=1 // pred_check_branch
      %22 = sbr.rel (0) target = $region17
    $region16: #{ddec_forward.3} parent=1 // pred_region
      _
    $region17: #{ddec_forward.3} parent=1 // pred_fallthru
      _
    %v23 = vld [vmem:[%s0] sm:$0xff]
    %v24 = vld [vmem:[%s0 + $0x8] sm:$0xff]
    %v25 = vld [vmem:[%s1] sm:$0xff]
    %v26 = vld [vmem:[%s1 + $0x8] sm:$0xff]
    %v27 = vld [vmem:[%s2] sm:$0x1]
    %vm28 = vcmask 130048
    %v30 = vsel %vm28, %v27, 0
    %v33 = vsel %vm28, %v25, 0
    %v36 = vsel %vm28, %v26, 0
    %38 = vmatpush.xpose.msra.mxu0 0.0
    %39 = vmatpush.xpose.msra.mxu0 0.0
    %40 = vmatpush.xpose.msra.mxu0 0.0
    %41 = vmatpush.xpose.msra.mxu0 0.0
    %42 = vmatpush.xpose.msra.mxu0 0.0
    %43 = vmatpush.xpose.msra.mxu0 0.0
    %44 = vmatpush.xpose.msra.mxu0 0.0
    %45 = vmatpush.xpose.msra.mxu0 0.0
    %46 = vmatpush.xpose.msra.mxu0 0.0
    %47 = vmatpush.xpose.msra.mxu0 0.0
    %48 = vmatpush.xpose.msra.mxu0 0.0
    %49 = vmatpush.xpose.msra.mxu0 0.0
    %50 = vmatpush.xpose.msra.mxu0 0.0
    %51 = vmatpush.xpose.msra.mxu0 0.0
    %52 = vmatpush.xpose.msra.mxu0 %v36
    %53 = vmatpush.xpose.msra.mxu0 %v33
    %54 = vmatmul.f32.gmra.mxu0 %v30
    %v55 = vpop.f32.mrf.mxu0
    %v56 = vadd.f32 0.0, %v55
    %57 = vdwg.mxu0
    %v59 = vsel %vm28, %v56, 0
    %v62 = vsel %vm28, %v23, 0
    %v65 = vsel %vm28, %v24, 0
    %67 = vmatpush.xpose.msra.mxu0 0.0
    %68 = vmatpush.xpose.msra.mxu0 0.0
    %69 = vmatpush.xpose.msra.mxu0 0.0
    %70 = vmatpush.xpose.msra.mxu0 0.0
    %71 = vmatpush.xpose.msra.mxu0 0.0
    %72 = vmatpush.xpose.msra.mxu0 0.0
    %73 = vmatpush.xpose.msra.mxu0 0.0
    %74 = vmatpush.xpose.msra.mxu0 0.0
    %75 = vmatpush.xpose.msra.mxu0 0.0
    %76 = vmatpush.xpose.msra.mxu0 0.0
    %77 = vmatpush.xpose.msra.mxu0 0.0
    %78 = vmatpush.xpose.msra.mxu0 0.0
    %79 = vmatpush.xpose.msra.mxu0 0.0
    %80 = vmatpush.xpose.msra.mxu0 0.0
    %81 = vmatpush.xpose.msra.mxu0 %v65
    %82 = vmatpush.xpose.msra.mxu0 %v62
    %83 = vmatmul.f32.gmra.mxu0 %v59
    %v84 = vpop.f32.mrf.mxu0
    %v85 = vadd.f32 0.0, %v84
    %86 = vdwg.mxu0
    %v87 = vsub.f32 %v85, %v27
    %v88 = vmul.f32 %v87, %v87
    %vm89 = vcmask 122880
    %v90 = vsel %vm89, %v88, 0.0
    %91 = vadd.xlane.f32.xlu0 %v90
    %v92 = vpop.xlane.xlu0 %91
    %vm93 = vcmp.lt.f32.partialorder %v92, 1e-12
    %vm94 = vmxor %vm93, 1
    %v96 = vsel %vm28, %v87, 0
    %98 = vmatpush.xpose.msra.mxu0 0.0
    %99 = vmatpush.xpose.msra.mxu0 0.0
    %100 = vmatpush.xpose.msra.mxu0 0.0
    %101 = vmatpush.xpose.msra.mxu0 0.0
    %102 = vmatpush.xpose.msra.mxu0 0.0
    %103 = vmatpush.xpose.msra.mxu0 0.0
    %104 = vmatpush.xpose.msra.mxu0 0.0
    %105 = vmatpush.xpose.msra.mxu0 0.0
    %106 = vmatpush.xpose.msra.mxu0 0.0
    %107 = vmatpush.xpose.msra.mxu0 0.0
    %108 = vmatpush.xpose.msra.mxu0 0.0
    %109 = vmatpush.xpose.msra.mxu0 0.0
    %110 = vmatpush.xpose.msra.mxu0 0.0
    %111 = vmatpush.xpose.msra.mxu0 0.0
    %112 = vmatpush.xpose.msra.mxu0 %v36
    %113 = vmatpush.xpose.msra.mxu0 %v33
    %114 = vmatmul.f32.gmra.mxu0 %v96
    %v115 = vpop.f32.mrf.mxu0
    %v116 = vadd.f32 0.0, %v115
    %117 = vdwg.mxu0
    %v118 = vsub.f32 %v56, %v116
    %v119 = vsel %vm94, 1, 0
    %vm120 = vcmp.eq.s32.totalorder %v119, 1
    %v121 = vsel %vm120, %v118, %v56
    %v123 = vsel %vm28, %v121, 0
    %125 = vmatpush.xpose.msra.mxu0 0.0
    %126 = vmatpush.xpose.msra.mxu0 0.0
    %127 = vmatpush.xpose.msra.mxu0 0.0
    %128 = vmatpush.xpose.msra.mxu0 0.0
    %129 = vmatpush.xpose.msra.mxu0 0.0
    %130 = vmatpush.xpose.msra.mxu0 0.0
    %131 = vmatpush.xpose.msra.mxu0 0.0
    %132 = vmatpush.xpose.msra.mxu0 0.0
    %133 = vmatpush.xpose.msra.mxu0 0.0
    %134 = vmatpush.xpose.msra.mxu0 0.0
    %135 = vmatpush.xpose.msra.mxu0 0.0
    %136 = vmatpush.xpose.msra.mxu0 0.0
    %137 = vmatpush.xpose.msra.mxu0 0.0
    %138 = vmatpush.xpose.msra.mxu0 0.0
    %139 = vmatpush.xpose.msra.mxu0 %v65
    %140 = vmatpush.xpose.msra.mxu0 %v62
    %141 = vmatmul.f32.gmra.mxu0 %v123
    %v142 = vpop.f32.mrf.mxu0
    %v143 = vadd.f32 0.0, %v142
    %144 = vdwg.mxu0
    %v145 = vsub.f32 %v143, %v27
    %v146 = vsel %vm120, %v145, %v87
    %v147 = vmul.f32 %v146, %v146
    %v148 = vsel %vm89, %v147, 0.0
    %149 = vadd.xlane.f32.xlu0 %v148
    %v150 = vpop.xlane.xlu0 %149
    %vm151 = vcmp.lt.f32.partialorder %v150, 1e-12
    %vm152 = vmxor %vm151, 1
    %v154 = vsel %vm28, %v146, 0
    %156 = vmatpush.xpose.msra.mxu0 0.0
    %157 = vmatpush.xpose.msra.mxu0 0.0
    %158 = vmatpush.xpose.msra.mxu0 0.0
    %159 = vmatpush.xpose.msra.mxu0 0.0
    %160 = vmatpush.xpose.msra.mxu0 0.0
    %161 = vmatpush.xpose.msra.mxu0 0.0
    %162 = vmatpush.xpose.msra.mxu0 0.0
    %163 = vmatpush.xpose.msra.mxu0 0.0
    %164 = vmatpush.xpose.msra.mxu0 0.0
    %165 = vmatpush.xpose.msra.mxu0 0.0
    %166 = vmatpush.xpose.msra.mxu0 0.0
    %167 = vmatpush.xpose.msra.mxu0 0.0
    %168 = vmatpush.xpose.msra.mxu0 0.0
    %169 = vmatpush.xpose.msra.mxu0 0.0
    %170 = vmatpush.xpose.msra.mxu0 %v36
    %171 = vmatpush.xpose.msra.mxu0 %v33
    %172 = vmatmul.f32.gmra.mxu0 %v154
    %v173 = vpop.f32.mrf.mxu0
    %v174 = vadd.f32 0.0, %v173
    %175 = vdwg.mxu0
    %v176 = vsub.f32 %v121, %v174
    %v177 = vsel %vm152, 1, 0
    %vm178 = vcmp.eq.s32.totalorder %v177, 1
    %v179 = vsel %vm178, %v176, %v121
    %v181 = vsel %vm28, %v179, 0
    %183 = vmatpush.xpose.msra.mxu0 0.0
    %184 = vmatpush.xpose.msra.mxu0 0.0
    %185 = vmatpush.xpose.msra.mxu0 0.0
    %186 = vmatpush.xpose.msra.mxu0 0.0
    %187 = vmatpush.xpose.msra.mxu0 0.0
    %188 = vmatpush.xpose.msra.mxu0 0.0
    %189 = vmatpush.xpose.msra.mxu0 0.0
    %190 = vmatpush.xpose.msra.mxu0 0.0
    %191 = vmatpush.xpose.msra.mxu0 0.0
    %192 = vmatpush.xpose.msra.mxu0 0.0
    %193 = vmatpush.xpose.msra.mxu0 0.0
    %194 = vmatpush.xpose.msra.mxu0 0.0
    %195 = vmatpush.xpose.msra.mxu0 0.0
    %196 = vmatpush.xpose.msra.mxu0 0.0
    %197 = vmatpush.xpose.msra.mxu0 %v65
    %198 = vmatpush.xpose.msra.mxu0 %v62
    %199 = vmatmul.f32.gmra.mxu0 %v181
    %v200 = vpop.f32.mrf.mxu0
    %v201 = vadd.f32 0.0, %v200
    %202 = vdwg.mxu0
    %v203 = vsub.f32 %v201, %v27
    %v204 = vsel %vm178, %v203, %v146
    %v205 = vmul.f32 %v204, %v204
    %v206 = vsel %vm89, %v205, 0.0
    %207 = vadd.xlane.f32.xlu0 %v206
    %v208 = vpop.xlane.xlu0 %207
    %vm209 = vcmp.lt.f32.partialorder %v208, 1e-12
    %vm210 = vmxor %vm209, 1
    %v212 = vsel %vm28, %v204, 0
    %214 = vmatpush.xpose.msra.mxu0 0.0
    %215 = vmatpush.xpose.msra.mxu0 0.0
    %216 = vmatpush.xpose.msra.mxu0 0.0
    %217 = vmatpush.xpose.msra.mxu0 0.0
    %218 = vmatpush.xpose.msra.mxu0 0.0
    %219 = vmatpush.xpose.msra.mxu0 0.0
    %220 = vmatpush.xpose.msra.mxu0 0.0
    %221 = vmatpush.xpose.msra.mxu0 0.0
    %222 = vmatpush.xpose.msra.mxu0 0.0
    %223 = vmatpush.xpose.msra.mxu0 0.0
    %224 = vmatpush.xpose.msra.mxu0 0.0
    %225 = vmatpush.xpose.msra.mxu0 0.0
    %226 = vmatpush.xpose.msra.mxu0 0.0
    %227 = vmatpush.xpose.msra.mxu0 0.0
    %228 = vmatpush.xpose.msra.mxu0 %v36
    %229 = vmatpush.xpose.msra.mxu0 %v33
    %230 = vmatmul.f32.gmra.mxu0 %v212
    %v231 = vpop.f32.mrf.mxu0
    %v232 = vadd.f32 0.0, %v231
    %233 = vdwg.mxu0
    %v234 = vsub.f32 %v179, %v232
    %v235 = vsel %vm210, 1, 0
    %vm236 = vcmp.eq.s32.totalorder %v235, 1
    %v237 = vsel %vm236, %v234, %v179
    %v239 = vsel %vm28, %v237, 0
    %241 = vmatpush.xpose.msra.mxu0 0.0
    %242 = vmatpush.xpose.msra.mxu0 0.0
    %243 = vmatpush.xpose.msra.mxu0 0.0
    %244 = vmatpush.xpose.msra.mxu0 0.0
    %245 = vmatpush.xpose.msra.mxu0 0.0
    %246 = vmatpush.xpose.msra.mxu0 0.0
    %247 = vmatpush.xpose.msra.mxu0 0.0
    %248 = vmatpush.xpose.msra.mxu0 0.0
    %249 = vmatpush.xpose.msra.mxu0 0.0
    %250 = vmatpush.xpose.msra.mxu0 0.0
    %251 = vmatpush.xpose.msra.mxu0 0.0
    %252 = vmatpush.xpose.msra.mxu0 0.0
    %253 = vmatpush.xpose.msra.mxu0 0.0
    %254 = vmatpush.xpose.msra.mxu0 0.0
    %255 = vmatpush.xpose.msra.mxu0 %v65
    %256 = vmatpush.xpose.msra.mxu0 %v62
    %257 = vmatmul.f32.gmra.mxu0 %v239
    %v258 = vpop.f32.mrf.mxu0
    %v259 = vadd.f32 0.0, %v258
    %260 = vdwg.mxu0
    %v261 = vsub.f32 %v259, %v27
    %v262 = vsel %vm236, %v261, %v204
    %v263 = vmul.f32 %v262, %v262
    %v264 = vsel %vm89, %v263, 0.0
    %265 = vadd.xlane.f32.xlu0 %v264
    %v266 = vpop.xlane.xlu0 %265
    %vm267 = vcmp.lt.f32.partialorder %v266, 1e-12
    %vm268 = vmxor %vm267, 1
    %v270 = vsel %vm28, %v262, 0
    %272 = vmatpush.xpose.msra.mxu0 0.0
    %273 = vmatpush.xpose.msra.mxu0 0.0
    %274 = vmatpush.xpose.msra.mxu0 0.0
    %275 = vmatpush.xpose.msra.mxu0 0.0
    %276 = vmatpush.xpose.msra.mxu0 0.0
    %277 = vmatpush.xpose.msra.mxu0 0.0
    %278 = vmatpush.xpose.msra.mxu0 0.0
    %279 = vmatpush.xpose.msra.mxu0 0.0
    %280 = vmatpush.xpose.msra.mxu0 0.0
    %281 = vmatpush.xpose.msra.mxu0 0.0
    %282 = vmatpush.xpose.msra.mxu0 0.0
    %283 = vmatpush.xpose.msra.mxu0 0.0
    %284 = vmatpush.xpose.msra.mxu0 0.0
    %285 = vmatpush.xpose.msra.mxu0 0.0
    %286 = vmatpush.xpose.msra.mxu0 %v36
    %287 = vmatpush.xpose.msra.mxu0 %v33
    %288 = vmatmul.f32.gmra.mxu0 %v270
    %v289 = vpop.f32.mrf.mxu0
    %v290 = vadd.f32 0.0, %v289
    %291 = vdwg.mxu0
    %v292 = vsub.f32 %v237, %v290
    %v293 = vsel %vm268, 1, 0
    %vm294 = vcmp.eq.s32.totalorder %v293, 1
    %v295 = vsel %vm294, %v292, %v237
    %v297 = vsel %vm28, %v295, 0
    %299 = vmatpush.xpose.msra.mxu0 0.0
    %300 = vmatpush.xpose.msra.mxu0 0.0
    %301 = vmatpush.xpose.msra.mxu0 0.0
    %302 = vmatpush.xpose.msra.mxu0 0.0
    %303 = vmatpush.xpose.msra.mxu0 0.0
    %304 = vmatpush.xpose.msra.mxu0 0.0
    %305 = vmatpush.xpose.msra.mxu0 0.0
    %306 = vmatpush.xpose.msra.mxu0 0.0
    %307 = vmatpush.xpose.msra.mxu0 0.0
    %308 = vmatpush.xpose.msra.mxu0 0.0
    %309 = vmatpush.xpose.msra.mxu0 0.0
    %310 = vmatpush.xpose.msra.mxu0 0.0
    %311 = vmatpush.xpose.msra.mxu0 0.0
    %312 = vmatpush.xpose.msra.mxu0 0.0
    %313 = vmatpush.xpose.msra.mxu0 %v65
    %314 = vmatpush.xpose.msra.mxu0 %v62
    %315 = vmatmul.f32.gmra.mxu0 %v297
    %v316 = vpop.f32.mrf.mxu0
    %v317 = vadd.f32 0.0, %v316
    %318 = vdwg.mxu0
    %v319 = vsub.f32 %v317, %v27
    %v320 = vsel %vm294, %v319, %v262
    %v321 = vmul.f32 %v320, %v320
    %v322 = vsel %vm89, %v321, 0.0
    %323 = vadd.xlane.f32.xlu0 %v322
    %v324 = vpop.xlane.xlu0 %323
    %vm325 = vcmp.lt.f32.partialorder %v324, 1e-12
    %vm326 = vmxor %vm325, 1
    %v328 = vsel %vm28, %v320, 0
    %330 = vmatpush.xpose.msra.mxu0 0.0
    %331 = vmatpush.xpose.msra.mxu0 0.0
    %332 = vmatpush.xpose.msra.mxu0 0.0
    %333 = vmatpush.xpose.msra.mxu0 0.0
    %334 = vmatpush.xpose.msra.mxu0 0.0
    %335 = vmatpush.xpose.msra.mxu0 0.0
    %336 = vmatpush.xpose.msra.mxu0 0.0
    %337 = vmatpush.xpose.msra.mxu0 0.0
    %338 = vmatpush.xpose.msra.mxu0 0.0
    %339 = vmatpush.xpose.msra.mxu0 0.0
    %340 = vmatpush.xpose.msra.mxu0 0.0
    %341 = vmatpush.xpose.msra.mxu0 0.0
    %342 = vmatpush.xpose.msra.mxu0 0.0
    %343 = vmatpush.xpose.msra.mxu0 0.0
    %344 = vmatpush.xpose.msra.mxu0 %v36
    %345 = vmatpush.xpose.msra.mxu0 %v33
    %346 = vmatmul.f32.gmra.mxu0 %v328
    %v347 = vpop.f32.mrf.mxu0
    %v348 = vadd.f32 0.0, %v347
    %349 = vdwg.mxu0
    %v350 = vsub.f32 %v295, %v348
    %v351 = vsel %vm326, 1, 0
    %vm352 = vcmp.eq.s32.totalorder %v351, 1
    %v353 = vsel %vm352, %v350, %v295
    %v355 = vsel %vm28, %v353, 0
    %357 = vmatpush.xpose.msra.mxu0 0.0
    %358 = vmatpush.xpose.msra.mxu0 0.0
    %359 = vmatpush.xpose.msra.mxu0 0.0
    %360 = vmatpush.xpose.msra.mxu0 0.0
    %361 = vmatpush.xpose.msra.mxu0 0.0
    %362 = vmatpush.xpose.msra.mxu0 0.0
    %363 = vmatpush.xpose.msra.mxu0 0.0
    %364 = vmatpush.xpose.msra.mxu0 0.0
    %365 = vmatpush.xpose.msra.mxu0 0.0
    %366 = vmatpush.xpose.msra.mxu0 0.0
    %367 = vmatpush.xpose.msra.mxu0 0.0
    %368 = vmatpush.xpose.msra.mxu0 0.0
    %369 = vmatpush.xpose.msra.mxu0 0.0
    %370 = vmatpush.xpose.msra.mxu0 0.0
    %371 = vmatpush.xpose.msra.mxu0 %v65
    %372 = vmatpush.xpose.msra.mxu0 %v62
    %373 = vmatmul.f32.gmra.mxu0 %v355
    %v374 = vpop.f32.mrf.mxu0
    %v375 = vadd.f32 0.0, %v374
    %376 = vdwg.mxu0
    %v377 = vsub.f32 %v375, %v27
    %v378 = vsel %vm352, %v377, %v320
    %v379 = vld [vmem:[%s3] sm:$0x1]
    %v380 = vsub.f32 %v379, %v353
    %v381 = vmul.f32 %v380, 2.0
    %v383 = vsel %vm28, %v381, 0
    %385 = vmatpush.msra.mxu0 0.0
    %386 = vmatpush.msra.mxu0 0.0
    %387 = vmatpush.msra.mxu0 0.0
    %388 = vmatpush.msra.mxu0 0.0
    %389 = vmatpush.msra.mxu0 0.0
    %390 = vmatpush.msra.mxu0 0.0
    %391 = vmatpush.msra.mxu0 0.0
    %392 = vmatpush.msra.mxu0 0.0
    %393 = vmatpush.msra.mxu0 0.0
    %394 = vmatpush.msra.mxu0 0.0
    %395 = vmatpush.msra.mxu0 0.0
    %396 = vmatpush.msra.mxu0 0.0
    %397 = vmatpush.msra.mxu0 0.0
    %398 = vmatpush.msra.mxu0 0.0
    %399 = vmatpush.msra.mxu0 %v26
    %400 = vmatpush.msra.mxu0 %v25
    %401 = vmatmul.f32.gmra.mxu0 %v383
    %v402 = vpop.f32.mrf.mxu0
    %v403 = vadd.f32 0.0, %v402
    %404 = vdwg.mxu0
    %405 = vst.msk [vmem:[#allocation2] sm:$0x1] %vm89, %v353
    %406 = vst.msk [vmem:[#allocation5] sm:$0x1] %vm89, %v403
    %v407 = vmul.f32 %v403, %v378
    %v408 = vsel %vm89, %v407, 0.0
    %409 = vadd.xlane.f32.xlu0 %v408
    %v410 = vpop.xlane.xlu0 %409
    %v411 = vrot.slane %v410, 4
    %v412 = vadd.f32 %v410, %v411
    %v413 = vrot.slane %v412, 2
    %v414 = vadd.f32 %v412, %v413
    %v415 = vrot.slane %v414, 1
    %v416 = vadd.f32 %v414, %v415
    %s417 = vtos %v416
    %s418 = scalar_lea.smem [#allocation7], 0
    %419 = sst [smem:[%s418]] %s417
    // Predicated region
    $region18: #{ddec_forward.3} parent=1 // pred_check
      _
    $region19: #{ddec_forward.3} parent=1 // pred_check_branch
      %421 = sbr.rel (0) target = $region21
    $region20: #{ddec_forward.3} parent=1 // pred_region
      %423 = vsyncadd [#allocation3], 0
      %s425 = sshll.u32 [#allocation2], 4
      %s426 = int_to_ptr.vmem [resolvable:$true] %s425
      %s427 = sshll.u32 %s4, 4
      %s428 = int_to_ptr.hbm [resolvable:$true] %s427
      %430 = dma.vmem_to_hbm [thread:$0]  %s426, 16, %s428, [#allocation3]
    $region21: #{ddec_forward.3} parent=1 // pred_fallthru
      _
    // Predicated region
    $region22: #{ddec_forward.3} parent=1 // pred_check
      _
    $region23: #{ddec_forward.3} parent=1 // pred_check_branch
      %432 = sbr.rel (0) target = $region25
    $region24: #{ddec_forward.3} parent=1 // pred_region
      %434 = vsyncadd [#allocation6], 0
      %s436 = sshll.u32 [#allocation5], 4
      %s437 = int_to_ptr.vmem [resolvable:$true] %s436
      %s438 = sshll.u32 %s5, 4
      %s439 = int_to_ptr.hbm [resolvable:$true] %s438
      %441 = dma.vmem_to_hbm [thread:$0]  %s437, 16, %s439, [#allocation6]
    $region25: #{ddec_forward.3} parent=1 // pred_fallthru
      _
    // Predicated region
    $region26: #{ddec_forward.3} parent=1 // pred_check
      _
    $region27: #{ddec_forward.3} parent=1 // pred_check_branch
      %443 = sbr.rel (0) target = $region29
    $region28: #{ddec_forward.3} parent=1 // pred_region
      %445 = vsyncadd [#allocation4], 0
      %s447 = sshll.u32 %s6, 4
      %s448 = int_to_ptr.hbm [resolvable:$true] %s447
      %450 = dma.smem_to_hbm [#allocation7], 16, %s448, [#allocation4]
    $region29: #{ddec_forward.3} parent=1 // pred_fallthru
      _
    // Predicated region
    $region30: #{ddec_forward.3} parent=1 // pred_check
      _
    $region31: #{ddec_forward.3} parent=1 // pred_check_branch
      %452 = sbr.rel (0) target = $region33
    $region32: #{ddec_forward.3} parent=1 // pred_region
      %454 = dma.done [#allocation3], 16
    $region33: #{ddec_forward.3} parent=1 // pred_fallthru
      _
    // Predicated region
    $region34: #{ddec_forward.3} parent=1 // pred_check
      _
    $region35: #{ddec_forward.3} parent=1 // pred_check_branch
      %456 = sbr.rel (0) target = $region37
    $region36: #{ddec_forward.3} parent=1 // pred_region
      %458 = dma.done [#allocation6], 16
    $region37: #{ddec_forward.3} parent=1 // pred_fallthru
      _
    // Predicated region
    $region38: #{ddec_forward.3} parent=1 // pred_check
      _
    $region39: #{ddec_forward.3} parent=1 // pred_check_branch
      %460 = sbr.rel (0) target = $region41
    $region40: #{ddec_forward.3} parent=1 // pred_region
      %462 = dma.done [#allocation4], 16
    $region41: #{ddec_forward.3} parent=1 // pred_fallthru
      _
    %463 = sfence
    %464 = vsyncpa [#allocation3], 1
    %465 = vsyncpa [#allocation6], 1
    %466 = vsyncpa [#allocation4], 1

</llo_original>
